<compile_context>
chip_gen: v6e
topology: v6e:2x2x1
jax: 0.10.0
libtpu: 0.0.40
codegen_flags: <defaults>
</compile_context>

<pallas_src>
import functools
import math

import jax
import jax.numpy as jnp
from jax.experimental import pallas as pl
from jax.experimental.pallas import tpu as pltpu


def _layer_norm(x, gamma, beta, eps=1e-5):
    mu = jnp.mean(x, axis=-1, keepdims=True)
    var = jnp.mean((x - mu) ** 2, axis=-1, keepdims=True)
    return (x - mu) * jax.lax.rsqrt(var + eps) * gamma + beta


def _encoder_layer_kernel(x_full_ref, pos_full_ref, x_tile_ref, pos_tile_ref,
                          wq_ref, wk_ref, wv_ref, bq_ref, bk_ref, bv_ref,
                          wo_ref, bo_ref, g1_ref, be1_ref,
                          w1_ref, b1_ref, w2_ref, b2_ref, g2_ref, be2_ref,
                          out_ref, k_scr, v_scr, ctx_scr,
                          *, nhead, seq_len):
    f32, bf16 = jnp.float32, jnp.bfloat16
    s_pad, d_model = k_scr.shape
    e_head = d_model // nhead

    # ---- K / V projections for the whole sequence, once per batch element ---
    # Full-width (S_pad, D) @ (D, D) matmuls (MXU K- and N-dense).
    @pl.when(pl.program_id(1) == 0)
    def _():
        x_f = x_full_ref[0]                                       # (S_pad, D) f32
        kv_in = (x_f + pos_full_ref[0]).astype(bf16)              # k input = src+pos
        k2 = jnp.dot(kv_in, wk_ref[...],
                     preferred_element_type=f32) + bk_ref[...]
        v2 = jnp.dot(x_f.astype(bf16), wv_ref[...],               # v input = src
                     preferred_element_type=f32) + bv_ref[...]
        k_scr[...] = k2.astype(bf16)
        v_scr[...] = v2.astype(bf16)

    # ---- Q projection for this query tile (scale folded into wq/bq) ---------
    x_t = x_tile_ref[0]                                           # (Tq, D) f32
    q_in = (x_t + pos_tile_ref[0]).astype(bf16)                   # q input = src+pos
    q2 = (jnp.dot(q_in, wq_ref[...],
                  preferred_element_type=f32) + bq_ref[...]).astype(bf16)

    k_all = k_scr[...]                                            # (S_pad, D) bf16
    v_all = v_scr[...]

    # Key-padding mask (only when S was padded).
    if seq_len != s_pad:
        key_mask = jax.lax.broadcasted_iota(jnp.int32, (1, s_pad), 1) < seq_len
    else:
        key_mask = None

    # ---- per-head scaled dot-product attention -------------------------------
    # Per-head contexts land in a (Tq, D) scratch via static lane slices so the
    # output projection can run as one dense (Tq, D) @ (D, D) matmul.
    for h in range(nhead):
        sl = slice(h * e_head, (h + 1) * e_head)
        qh = q2[:, sl]                                            # (Tq, E) bf16
        kh = k_all[:, sl]                                         # (S_pad, E) bf16
        vh = v_all[:, sl]
        s = jax.lax.dot_general(qh, kh, (((1,), (1,)), ((), ())),
                                preferred_element_type=f32)       # (Tq, S_pad) f32
        if key_mask is not None:
            s = jnp.where(key_mask, s, -1e30)
        s = s - jnp.max(s, axis=-1, keepdims=True)
        p = jnp.exp(s)
        p = p * pl.reciprocal(jnp.sum(p, axis=-1, keepdims=True), approx=False)
        ctx_scr[:, sl] = jnp.dot(p.astype(bf16), vh,
                                 preferred_element_type=f32)      # (Tq, E) f32

    # ---- fused output projection: (Tq, D) @ (D, D) ---------------------------
    attn = jnp.dot(ctx_scr[...].astype(bf16), wo_ref[...],
                   preferred_element_type=f32) + bo_ref[...]      # (Tq, D) f32

    # ---- residual + LayerNorm1 ------------------------------------------------
    src1 = _layer_norm(x_t + attn, g1_ref[...], be1_ref[...])

    # ---- feed-forward: linear2(relu(linear1(src))) ----------------------------
    h1 = jnp.dot(src1.astype(bf16), w1_ref[...],
                 preferred_element_type=f32) + b1_ref[...]
    h1 = jnp.maximum(h1, 0.0)
    h2 = jnp.dot(h1.astype(bf16), w2_ref[...],
                 preferred_element_type=f32) + b2_ref[...]

    # ---- residual + LayerNorm2 ------------------------------------------------
    out = _layer_norm(src1 + h2, g2_ref[...], be2_ref[...])
    out_ref[0] = out.astype(out_ref.dtype)


def transformer_encoder_layer(src, pos, params, nhead):
    """src, pos: (S, B, D) float32.  Returns (S, B, D) float32."""
    S, B, D = src.shape
    H = nhead
    E = D // H
    assert H * E == D
    Dff = params["w1"].shape[0]

    f32, bf16 = jnp.float32, jnp.bfloat16

    def round_up(a, m):
        return (a + m - 1) // m * m

    # Query-tile / padding selection (ragged S supported via key masking).
    if S <= 128:
        Tq = round_up(S, 8)
        S_pad = Tq
    else:
        Tq = 128                      # TODO(synk): Tq=256 on v6e (128 MiB VMEM)
        S_pad = round_up(S, Tq)
    num_q = S_pad // Tq

    # (B, S_pad, D): contiguous (S, D) slabs per batch element for the DMAs.
    x = jnp.transpose(src, (1, 0, 2)).astype(f32)
    p = jnp.transpose(pos, (1, 0, 2)).astype(f32)
    if S_pad != S:
        pad = ((0, 0), (0, S_pad - S), (0, 0))
        x = jnp.pad(x, pad)
        p = jnp.pad(p, pad)

    # Host-side weight prep: PyTorch y = x @ W.T + b -> pre-transposed bf16.
    # Softmax scale folded into the query projection (weights AND bias).
    scale = 1.0 / math.sqrt(E)
    wq_t = (params["wq"].T * scale).astype(bf16)
    bq_s = (params["bq"] * scale).astype(f32)
    wk_t = params["wk"].T.astype(bf16)
    wv_t = params["wv"].T.astype(bf16)
    wo_t = params["wo"].T.astype(bf16)
    w1_t = params["w1"].T.astype(bf16)                    # (D, Dff)
    w2_t = params["w2"].T.astype(bf16)                    # (Dff, D)
    bk = params["bk"].astype(f32)
    bv = params["bv"].astype(f32)
    bo = params["bo"].astype(f32)
    b1 = params["bl1"].astype(f32)
    b2 = params["bl2"].astype(f32)
    g1, be1 = params["g1"].astype(f32), params["be1"].astype(f32)
    g2, be2 = params["g2"].astype(f32), params["be2"].astype(f32)

    def const_spec(shape):
        nd = len(shape)
        return pl.BlockSpec(shape, lambda b, q, nd=nd: (0,) * nd)

    kernel = functools.partial(_encoder_layer_kernel, nhead=H, seq_len=S)

    out = pl.pallas_call(
        kernel,
        out_shape=jax.ShapeDtypeStruct((B, S_pad, D), jnp.float32),
        grid_spec=pltpu.PrefetchScalarGridSpec(
            num_scalar_prefetch=0,
            grid=(B, num_q),
            in_specs=[
                pl.BlockSpec((1, S_pad, D), lambda b, q: (b, 0, 0)),  # x, full seq
                pl.BlockSpec((1, S_pad, D), lambda b, q: (b, 0, 0)),  # pos, full seq
                pl.BlockSpec((1, Tq, D), lambda b, q: (b, q, 0)),     # x, query tile
                pl.BlockSpec((1, Tq, D), lambda b, q: (b, q, 0)),     # pos, query tile
                const_spec((D, D)), const_spec((D, D)), const_spec((D, D)),
                const_spec((1, D)), const_spec((1, D)), const_spec((1, D)),
                const_spec((D, D)), const_spec((1, D)),
                const_spec((1, D)), const_spec((1, D)),
                const_spec((D, Dff)), const_spec((1, Dff)),
                const_spec((Dff, D)), const_spec((1, D)),
                const_spec((1, D)), const_spec((1, D)),
            ],
            out_specs=pl.BlockSpec((1, Tq, D), lambda b, q: (b, q, 0)),
            scratch_shapes=[pltpu.VMEM((S_pad, D), bf16),   # K cache (per batch elem)
                            pltpu.VMEM((S_pad, D), bf16),   # V cache
                            pltpu.VMEM((Tq, D), f32)],      # merged per-head context
        ),
        compiler_params=pltpu.CompilerParams(
            # query-tile axis is "arbitrary": tile 0 fills the K/V scratch.
            dimension_semantics=("parallel", "arbitrary"),
            vmem_limit_bytes=48 * 1024 * 1024),
    )(x, p, x, p,
      wq_t, wk_t, wv_t, bq_s, bk, bv,
      wo_t, bo, g1, be1, w1_t, b1, w2_t, b2, g2, be2)

    out = out[:, :S, :]                       # drop padded query rows
    return jnp.transpose(out, (1, 0, 2))      # back to (S, B, D)


def reference_layer(src, pos, params, nhead):
    """Pure-JAX f32 reference with identical math (eval mode, forward_post)."""
    S, B, D = src.shape
    Hd = D // nhead
    scale = 1.0 / math.sqrt(Hd)

    x = jnp.transpose(src, (1, 0, 2))
    p = jnp.transpose(pos, (1, 0, 2))
    qk_in = x + p

    q = qk_in @ params["wq"].T + params["bq"]
    k = qk_in @ params["wk"].T + params["bk"]
    v = x @ params["wv"].T + params["bv"]

    def split(t):  # (B, S, D) -> (B, H, S, Hd)
        return t.reshape(B, S, nhead, Hd).transpose(0, 2, 1, 3)

    qh, kh, vh = split(q), split(k), split(v)
    s = jnp.einsum("bhqd,bhkd->bhqk", qh, kh) * scale
    pattn = jax.nn.softmax(s, axis=-1)
    o = jnp.einsum("bhqk,bhkd->bhqd", pattn, vh)
    o = o.transpose(0, 2, 1, 3).reshape(B, S, D)
    o = o @ params["wo"].T + params["bo"]

    src2 = x + o
    src2 = _layer_norm(src2, params["g1"], params["be1"])
    h1 = jnp.maximum(src2 @ params["w1"].T + params["bl1"], 0.0)
    h2 = h1 @ params["w2"].T + params["bl2"]
    src2 = _layer_norm(src2 + h2, params["g2"], params["be2"])
    return jnp.transpose(src2, (1, 0, 2))


if __name__ == "__main__":
    # Small shapes consistent with the module: seq=8, batch=2, d_model=32,
    # nhead=4, dim_feedforward=64.
    S, B, D, H, Dff = 8, 2, 32, 4, 64
    key = jax.random.PRNGKey(0)
    ks = jax.random.split(key, 16)

    src = jax.random.normal(ks[0], (S, B, D), jnp.float32)
    pos = jax.random.normal(ks[1], (S, B, D), jnp.float32) * 0.1

    def winit(k, shape, fan_in):
        return jax.random.normal(k, shape, jnp.float32) / math.sqrt(fan_in)

    params = {
        # MultiheadAttention in_proj split into q/k/v (each (D, D)) + biases.
        "wq": winit(ks[2], (D, D), D), "bq": jnp.zeros((1, D), jnp.float32),
        "wk": winit(ks[3], (D, D), D), "bk": jnp.zeros((1, D), jnp.float32),
        "wv": winit(ks[4], (D, D), D), "bv": jnp.zeros((1, D), jnp.float32),
        "wo": winit(ks[5], (D, D), D),
        "bo": 0.01 * jax.random.normal(ks[6], (1, D), jnp.float32),
        # LayerNorm1 / LayerNorm2 (gamma=1, beta=0 at init).
        "g1": jnp.ones((1, D), jnp.float32), "be1": jnp.zeros((1, D), jnp.float32),
        "g2": jnp.ones((1, D), jnp.float32), "be2": jnp.zeros((1, D), jnp.float32),
        # Feed-forward linear1: (Dff, D); linear2: (D, Dff) — PyTorch layout.
        "w1": winit(ks[7], (Dff, D), D),
        "bl1": 0.01 * jax.random.normal(ks[8], (1, Dff), jnp.float32),
        "w2": winit(ks[9], (D, Dff), Dff),
        "bl2": 0.01 * jax.random.normal(ks[10], (1, D), jnp.float32),
    }

    # Tolerance: bf16 matmul operands with f32 accumulation across five chained
    # matmuls (pure-f32 reference); exact softmax reciprocal.
    ATOL, RTOL = 5e-2, 2e-2

    # --- test 1: regular shape ------------------------------------------------
    out = transformer_encoder_layer(src, pos, params, nhead=H)
    out = jax.block_until_ready(out)
    ref = reference_layer(src, pos, params, nhead=H)
    assert out.shape == (S, B, D)
    err = jnp.max(jnp.abs(out - ref))
    assert jnp.allclose(out, ref, atol=ATOL, rtol=RTOL), f"max abs err {err}"

    # --- test 2: ragged sequence length (exercises padding + key masking) -----
    S2 = 10
    src2 = jax.random.normal(ks[11], (S2, B, D), jnp.float32)
    pos2 = jax.random.normal(ks[12], (S2, B, D), jnp.float32) * 0.1
    out2 = transformer_encoder_layer(src2, pos2, params, nhead=H)
    out2 = jax.block_until_ready(out2)
    ref2 = reference_layer(src2, pos2, params, nhead=H)
    assert out2.shape == (S2, B, D)
    err2 = jnp.max(jnp.abs(out2 - ref2))
    assert jnp.allclose(out2, ref2, atol=ATOL, rtol=RTOL), f"max abs err {err2}"

    print("KERNEL_OK")
</pallas_src>

<mosaic_0001>
module attributes {stable_mosaic.version = 11 : i64} {
  func.func @_encoder_layer_kernel(%arg0: i32, %arg1: i32, %arg2: memref<1x8x32xf32, #tpu.memory_space<vmem>>, %arg3: memref<1x8x32xf32, #tpu.memory_space<vmem>>, %arg4: memref<1x8x32xf32, #tpu.memory_space<vmem>>, %arg5: memref<1x8x32xf32, #tpu.memory_space<vmem>>, %arg6: memref<32x32xbf16, #tpu.memory_space<vmem>>, %arg7: memref<32x32xbf16, #tpu.memory_space<vmem>>, %arg8: memref<32x32xbf16, #tpu.memory_space<vmem>>, %arg9: memref<1x32xf32, #tpu.memory_space<vmem>>, %arg10: memref<1x32xf32, #tpu.memory_space<vmem>>, %arg11: memref<1x32xf32, #tpu.memory_space<vmem>>, %arg12: memref<32x32xbf16, #tpu.memory_space<vmem>>, %arg13: memref<1x32xf32, #tpu.memory_space<vmem>>, %arg14: memref<1x32xf32, #tpu.memory_space<vmem>>, %arg15: memref<1x32xf32, #tpu.memory_space<vmem>>, %arg16: memref<32x64xbf16, #tpu.memory_space<vmem>>, %arg17: memref<1x64xf32, #tpu.memory_space<vmem>>, %arg18: memref<64x32xbf16, #tpu.memory_space<vmem>>, %arg19: memref<1x32xf32, #tpu.memory_space<vmem>>, %arg20: memref<1x32xf32, #tpu.memory_space<vmem>>, %arg21: memref<1x32xf32, #tpu.memory_space<vmem>>, %arg22: memref<1x8x32xf32, #tpu.memory_space<vmem>>, %arg23: memref<8x32xbf16, #tpu.memory_space<vmem>>, %arg24: memref<8x32xbf16, #tpu.memory_space<vmem>>, %arg25: memref<8x32xf32, #tpu.memory_space<vmem>>) attributes {dimension_semantics = [#tpu.dimension_semantics<parallel>, #tpu.dimension_semantics<arbitrary>], iteration_bounds = array<i64: 2, 1>, scalar_prefetch = 0 : i64, scratch_operands = 3 : i64, tpu.core_type = #tpu.core_type<tc>, window_params = [{transform_indices = @transform_0, window_bounds = array<i64: 1, 8, 32>}, {transform_indices = @transform_1, window_bounds = array<i64: 1, 8, 32>}, {transform_indices = @transform_2, window_bounds = array<i64: 1, 8, 32>}, {transform_indices = @transform_3, window_bounds = array<i64: 1, 8, 32>}, {pipeline_mode = #tpu.pipeline_mode<synchronous>, transform_indices = @transform_4, window_bounds = array<i64: 32, 32>}, {pipeline_mode = #tpu.pipeline_mode<synchronous>, transform_indices = @transform_5, window_bounds = array<i64: 32, 32>}, {pipeline_mode = #tpu.pipeline_mode<synchronous>, transform_indices = @transform_6, window_bounds = array<i64: 32, 32>}, {pipeline_mode = #tpu.pipeline_mode<synchronous>, transform_indices = @transform_7, window_bounds = array<i64: 1, 32>}, {pipeline_mode = #tpu.pipeline_mode<synchronous>, transform_indices = @transform_8, window_bounds = array<i64: 1, 32>}, {pipeline_mode = #tpu.pipeline_mode<synchronous>, transform_indices = @transform_9, window_bounds = array<i64: 1, 32>}, {pipeline_mode = #tpu.pipeline_mode<synchronous>, transform_indices = @transform_10, window_bounds = array<i64: 32, 32>}, {pipeline_mode = #tpu.pipeline_mode<synchronous>, transform_indices = @transform_11, window_bounds = array<i64: 1, 32>}, {pipeline_mode = #tpu.pipeline_mode<synchronous>, transform_indices = @transform_12, window_bounds = array<i64: 1, 32>}, {pipeline_mode = #tpu.pipeline_mode<synchronous>, transform_indices = @transform_13, window_bounds = array<i64: 1, 32>}, {pipeline_mode = #tpu.pipeline_mode<synchronous>, transform_indices = @transform_14, window_bounds = array<i64: 32, 64>}, {pipeline_mode = #tpu.pipeline_mode<synchronous>, transform_indices = @transform_15, window_bounds = array<i64: 1, 64>}, {pipeline_mode = #tpu.pipeline_mode<synchronous>, transform_indices = @transform_16, window_bounds = array<i64: 64, 32>}, {pipeline_mode = #tpu.pipeline_mode<synchronous>, transform_indices = @transform_17, window_bounds = array<i64: 1, 32>}, {pipeline_mode = #tpu.pipeline_mode<synchronous>, transform_indices = @transform_18, window_bounds = array<i64: 1, 32>}, {pipeline_mode = #tpu.pipeline_mode<synchronous>, transform_indices = @transform_19, window_bounds = array<i64: 1, 32>}, {transform_indices = @transform_20, window_bounds = array<i64: 1, 8, 32>}]} {
    %c0_i32 = arith.constant 0 : i32
    %0 = arith.cmpi eq, %arg1, %c0_i32 : i32
    %1 = arith.extui %0 : i1 to i32
    %c0_i32_0 = arith.constant 0 : i32
    %2 = arith.cmpi ne, %1, %c0_i32_0 : i32
    scf.if %2 {
      %c0_74 = arith.constant 0 : index
      %c0_75 = arith.constant 0 : index
      %c0_76 = arith.constant 0 : index
      %159 = vector.load %arg2[%c0_74, %c0_75, %c0_76] : memref<1x8x32xf32, #tpu.memory_space<vmem>>, vector<1x8x32xf32>
      %160 = vector.shape_cast %159 : vector<1x8x32xf32> to vector<8x32xf32>
      %c0_77 = arith.constant 0 : index
      %c0_78 = arith.constant 0 : index
      %c0_79 = arith.constant 0 : index
      %161 = vector.load %arg3[%c0_77, %c0_78, %c0_79] : memref<1x8x32xf32, #tpu.memory_space<vmem>>, vector<1x8x32xf32>
      %162 = vector.shape_cast %161 : vector<1x8x32xf32> to vector<8x32xf32>
      %163 = arith.addf %160, %162 : vector<8x32xf32>
      %164 = arith.truncf %163 : vector<8x32xf32> to vector<8x32xbf16>
      %c0_80 = arith.constant 0 : index
      %c0_81 = arith.constant 0 : index
      %165 = vector.load %arg7[%c0_80, %c0_81] : memref<32x32xbf16, #tpu.memory_space<vmem>>, vector<32x32xbf16>
      %cst_82 = arith.constant dense<0.000000e+00> : vector<8x32xf32>
      %166 = tpu.matmul %164, %165, %cst_82 {dimension_numbers = #tpu.dot_dimension_numbers<[1], [0], [0], [1], [0, 0, 1, 1], [], []>} : vector<8x32xbf16>, vector<32x32xbf16>, vector<8x32xf32> -> vector<8x32xf32>
      %c0_83 = arith.constant 0 : index
      %c0_84 = arith.constant 0 : index
      %167 = vector.load %arg10[%c0_83, %c0_84] : memref<1x32xf32, #tpu.memory_space<vmem>>, vector<1x32xf32>
      %168 = vector.broadcast %167 : vector<1x32xf32> to vector<8x32xf32>
      %169 = arith.addf %166, %168 : vector<8x32xf32>
      %170 = arith.truncf %160 : vector<8x32xf32> to vector<8x32xbf16>
      %c0_85 = arith.constant 0 : index
      %c0_86 = arith.constant 0 : index
      %171 = vector.load %arg8[%c0_85, %c0_86] : memref<32x32xbf16, #tpu.memory_space<vmem>>, vector<32x32xbf16>
      %cst_87 = arith.constant dense<0.000000e+00> : vector<8x32xf32>
      %172 = tpu.matmul %170, %171, %cst_87 {dimension_numbers = #tpu.dot_dimension_numbers<[1], [0], [0], [1], [0, 0, 1, 1], [], []>} : vector<8x32xbf16>, vector<32x32xbf16>, vector<8x32xf32> -> vector<8x32xf32>
      %c0_88 = arith.constant 0 : index
      %c0_89 = arith.constant 0 : index
      %173 = vector.load %arg11[%c0_88, %c0_89] : memref<1x32xf32, #tpu.memory_space<vmem>>, vector<1x32xf32>
      %174 = vector.broadcast %173 : vector<1x32xf32> to vector<8x32xf32>
      %175 = arith.addf %172, %174 : vector<8x32xf32>
      %176 = arith.truncf %169 : vector<8x32xf32> to vector<8x32xbf16>
      %c0_90 = arith.constant 0 : index
      %c0_91 = arith.constant 0 : index
      %177 = vector.load %arg23[%c0_90, %c0_91] : memref<8x32xbf16, #tpu.memory_space<vmem>>, vector<8x32xbf16>
      tpu.vector_store %arg23[%c0_90, %c0_91], %176 {strides = array<i32>} : memref<8x32xbf16, #tpu.memory_space<vmem>>, vector<8x32xbf16>,
      %178 = arith.truncf %175 : vector<8x32xf32> to vector<8x32xbf16>
      %c0_92 = arith.constant 0 : index
      %c0_93 = arith.constant 0 : index
      %179 = vector.load %arg24[%c0_92, %c0_93] : memref<8x32xbf16, #tpu.memory_space<vmem>>, vector<8x32xbf16>
      tpu.vector_store %arg24[%c0_92, %c0_93], %178 {strides = array<i32>} : memref<8x32xbf16, #tpu.memory_space<vmem>>, vector<8x32xbf16>,
    } else {
    }
    %c0 = arith.constant 0 : index
    %c0_1 = arith.constant 0 : index
    %c0_2 = arith.constant 0 : index
    %3 = vector.load %arg4[%c0, %c0_1, %c0_2] : memref<1x8x32xf32, #tpu.memory_space<vmem>>, vector<1x8x32xf32>
    %4 = vector.shape_cast %3 : vector<1x8x32xf32> to vector<8x32xf32>
    %c0_3 = arith.constant 0 : index
    %c0_4 = arith.constant 0 : index
    %c0_5 = arith.constant 0 : index
    %5 = vector.load %arg5[%c0_3, %c0_4, %c0_5] : memref<1x8x32xf32, #tpu.memory_space<vmem>>, vector<1x8x32xf32>
    %6 = vector.shape_cast %5 : vector<1x8x32xf32> to vector<8x32xf32>
    %7 = arith.addf %4, %6 : vector<8x32xf32>
    %8 = arith.truncf %7 : vector<8x32xf32> to vector<8x32xbf16>
    %c0_6 = arith.constant 0 : index
    %c0_7 = arith.constant 0 : index
    %9 = vector.load %arg6[%c0_6, %c0_7] : memref<32x32xbf16, #tpu.memory_space<vmem>>, vector<32x32xbf16>
    %cst = arith.constant dense<0.000000e+00> : vector<8x32xf32>
    %10 = tpu.matmul %8, %9, %cst {dimension_numbers = #tpu.dot_dimension_numbers<[1], [0], [0], [1], [0, 0, 1, 1], [], []>} : vector<8x32xbf16>, vector<32x32xbf16>, vector<8x32xf32> -> vector<8x32xf32>
    %c0_8 = arith.constant 0 : index
    %c0_9 = arith.constant 0 : index
    %11 = vector.load %arg9[%c0_8, %c0_9] : memref<1x32xf32, #tpu.memory_space<vmem>>, vector<1x32xf32>
    %12 = vector.broadcast %11 : vector<1x32xf32> to vector<8x32xf32>
    %13 = arith.addf %10, %12 : vector<8x32xf32>
    %14 = arith.truncf %13 : vector<8x32xf32> to vector<8x32xbf16>
    %c0_10 = arith.constant 0 : index
    %c0_11 = arith.constant 0 : index
    %15 = vector.load %arg23[%c0_10, %c0_11] : memref<8x32xbf16, #tpu.memory_space<vmem>>, vector<8x32xbf16>
    %c0_12 = arith.constant 0 : index
    %c0_13 = arith.constant 0 : index
    %16 = vector.load %arg24[%c0_12, %c0_13] : memref<8x32xbf16, #tpu.memory_space<vmem>>, vector<8x32xbf16>
    %17 = vector.extract_strided_slice %14 {offsets = [0, 0], sizes = [8, 8], strides = [1, 1]} : vector<8x32xbf16> to vector<8x8xbf16>
    %18 = vector.extract_strided_slice %15 {offsets = [0, 0], sizes = [8, 8], strides = [1, 1]} : vector<8x32xbf16> to vector<8x8xbf16>
    %19 = vector.extract_strided_slice %16 {offsets = [0, 0], sizes = [8, 8], strides = [1, 1]} : vector<8x32xbf16> to vector<8x8xbf16>
    %cst_14 = arith.constant dense<0.000000e+00> : vector<8x8xf32>
    %20 = tpu.matmul %17, %18, %cst_14 {dimension_numbers = #tpu.dot_dimension_numbers<[1], [1], [0], [0], [0, 0, 1, 0], [], []>} : vector<8x8xbf16>, vector<8x8xbf16>, vector<8x8xf32> -> vector<8x8xf32>
    %cst_15 = arith.constant dense<0xFF800000> : vector<8xf32>
    %21 = vector.multi_reduction <maximumf>, %20, %cst_15 [1] : vector<8x8xf32> to vector<8xf32>
    %22 = vector.shape_cast %21 : vector<8xf32> to vector<8x1xf32>
    %23 = vector.broadcast %22 : vector<8x1xf32> to vector<8x8xf32>
    %24 = arith.subf %20, %23 : vector<8x8xf32>
    %25 = math.exp %24 : vector<8x8xf32>
    %cst_16 = arith.constant dense<0.000000e+00> : vector<8xf32>
    %26 = vector.multi_reduction <add>, %25, %cst_16 [1] : vector<8x8xf32> to vector<8xf32>
    %27 = vector.shape_cast %26 : vector<8xf32> to vector<8x1xf32>
    %28 = tpu.reciprocal %27 : vector<8x1xf32> -> vector<8x1xf32>
    %29 = vector.broadcast %28 : vector<8x1xf32> to vector<8x8xf32>
    %30 = arith.mulf %25, %29 : vector<8x8xf32>
    %31 = arith.truncf %30 : vector<8x8xf32> to vector<8x8xbf16>
    %cst_17 = arith.constant dense<0.000000e+00> : vector<8x8xf32>
    %32 = tpu.matmul %31, %19, %cst_17 {dimension_numbers = #tpu.dot_dimension_numbers<[1], [0], [0], [1], [0, 0, 1, 1], [], []>} : vector<8x8xbf16>, vector<8x8xbf16>, vector<8x8xf32> -> vector<8x8xf32>
    %c0_18 = arith.constant 0 : index
    %c0_19 = arith.constant 0 : index
    %33 = vector.load %arg25[%c0_18, %c0_19] : memref<8x32xf32, #tpu.memory_space<vmem>>, vector<8x8xf32>
    tpu.vector_store %arg25[%c0_18, %c0_19], %32 {strides = array<i32>} : memref<8x32xf32, #tpu.memory_space<vmem>>, vector<8x8xf32>,
    %34 = vector.extract_strided_slice %14 {offsets = [0, 8], sizes = [8, 8], strides = [1, 1]} : vector<8x32xbf16> to vector<8x8xbf16>
    %35 = vector.extract_strided_slice %15 {offsets = [0, 8], sizes = [8, 8], strides = [1, 1]} : vector<8x32xbf16> to vector<8x8xbf16>
    %36 = vector.extract_strided_slice %16 {offsets = [0, 8], sizes = [8, 8], strides = [1, 1]} : vector<8x32xbf16> to vector<8x8xbf16>
    %cst_20 = arith.constant dense<0.000000e+00> : vector<8x8xf32>
    %37 = tpu.matmul %34, %35, %cst_20 {dimension_numbers = #tpu.dot_dimension_numbers<[1], [1], [0], [0], [0, 0, 1, 0], [], []>} : vector<8x8xbf16>, vector<8x8xbf16>, vector<8x8xf32> -> vector<8x8xf32>
    %cst_21 = arith.constant dense<0xFF800000> : vector<8xf32>
    %38 = vector.multi_reduction <maximumf>, %37, %cst_21 [1] : vector<8x8xf32> to vector<8xf32>
    %39 = vector.shape_cast %38 : vector<8xf32> to vector<8x1xf32>
    %40 = vector.broadcast %39 : vector<8x1xf32> to vector<8x8xf32>
    %41 = arith.subf %37, %40 : vector<8x8xf32>
    %42 = math.exp %41 : vector<8x8xf32>
    %cst_22 = arith.constant dense<0.000000e+00> : vector<8xf32>
    %43 = vector.multi_reduction <add>, %42, %cst_22 [1] : vector<8x8xf32> to vector<8xf32>
    %44 = vector.shape_cast %43 : vector<8xf32> to vector<8x1xf32>
    %45 = tpu.reciprocal %44 : vector<8x1xf32> -> vector<8x1xf32>
    %46 = vector.broadcast %45 : vector<8x1xf32> to vector<8x8xf32>
    %47 = arith.mulf %42, %46 : vector<8x8xf32>
    %48 = arith.truncf %47 : vector<8x8xf32> to vector<8x8xbf16>
    %cst_23 = arith.constant dense<0.000000e+00> : vector<8x8xf32>
    %49 = tpu.matmul %48, %36, %cst_23 {dimension_numbers = #tpu.dot_dimension_numbers<[1], [0], [0], [1], [0, 0, 1, 1], [], []>} : vector<8x8xbf16>, vector<8x8xbf16>, vector<8x8xf32> -> vector<8x8xf32>
    %c0_24 = arith.constant 0 : index
    %c8 = arith.constant 8 : index
    %50 = vector.load %arg25[%c0_24, %c8] : memref<8x32xf32, #tpu.memory_space<vmem>>, vector<8x8xf32>
    tpu.vector_store %arg25[%c0_24, %c8], %49 {strides = array<i32>} : memref<8x32xf32, #tpu.memory_space<vmem>>, vector<8x8xf32>,
    %51 = vector.extract_strided_slice %14 {offsets = [0, 16], sizes = [8, 8], strides = [1, 1]} : vector<8x32xbf16> to vector<8x8xbf16>
    %52 = vector.extract_strided_slice %15 {offsets = [0, 16], sizes = [8, 8], strides = [1, 1]} : vector<8x32xbf16> to vector<8x8xbf16>
    %53 = vector.extract_strided_slice %16 {offsets = [0, 16], sizes = [8, 8], strides = [1, 1]} : vector<8x32xbf16> to vector<8x8xbf16>
    %cst_25 = arith.constant dense<0.000000e+00> : vector<8x8xf32>
    %54 = tpu.matmul %51, %52, %cst_25 {dimension_numbers = #tpu.dot_dimension_numbers<[1], [1], [0], [0], [0, 0, 1, 0], [], []>} : vector<8x8xbf16>, vector<8x8xbf16>, vector<8x8xf32> -> vector<8x8xf32>
    %cst_26 = arith.constant dense<0xFF800000> : vector<8xf32>
    %55 = vector.multi_reduction <maximumf>, %54, %cst_26 [1] : vector<8x8xf32> to vector<8xf32>
    %56 = vector.shape_cast %55 : vector<8xf32> to vector<8x1xf32>
    %57 = vector.broadcast %56 : vector<8x1xf32> to vector<8x8xf32>
    %58 = arith.subf %54, %57 : vector<8x8xf32>
    %59 = math.exp %58 : vector<8x8xf32>
    %cst_27 = arith.constant dense<0.000000e+00> : vector<8xf32>
    %60 = vector.multi_reduction <add>, %59, %cst_27 [1] : vector<8x8xf32> to vector<8xf32>
    %61 = vector.shape_cast %60 : vector<8xf32> to vector<8x1xf32>
    %62 = tpu.reciprocal %61 : vector<8x1xf32> -> vector<8x1xf32>
    %63 = vector.broadcast %62 : vector<8x1xf32> to vector<8x8xf32>
    %64 = arith.mulf %59, %63 : vector<8x8xf32>
    %65 = arith.truncf %64 : vector<8x8xf32> to vector<8x8xbf16>
    %cst_28 = arith.constant dense<0.000000e+00> : vector<8x8xf32>
    %66 = tpu.matmul %65, %53, %cst_28 {dimension_numbers = #tpu.dot_dimension_numbers<[1], [0], [0], [1], [0, 0, 1, 1], [], []>} : vector<8x8xbf16>, vector<8x8xbf16>, vector<8x8xf32> -> vector<8x8xf32>
    %c0_29 = arith.constant 0 : index
    %c16 = arith.constant 16 : index
    %67 = vector.load %arg25[%c0_29, %c16] : memref<8x32xf32, #tpu.memory_space<vmem>>, vector<8x8xf32>
    tpu.vector_store %arg25[%c0_29, %c16], %66 {strides = array<i32>} : memref<8x32xf32, #tpu.memory_space<vmem>>, vector<8x8xf32>,
    %68 = vector.extract_strided_slice %14 {offsets = [0, 24], sizes = [8, 8], strides = [1, 1]} : vector<8x32xbf16> to vector<8x8xbf16>
    %69 = vector.extract_strided_slice %15 {offsets = [0, 24], sizes = [8, 8], strides = [1, 1]} : vector<8x32xbf16> to vector<8x8xbf16>
    %70 = vector.extract_strided_slice %16 {offsets = [0, 24], sizes = [8, 8], strides = [1, 1]} : vector<8x32xbf16> to vector<8x8xbf16>
    %cst_30 = arith.constant dense<0.000000e+00> : vector<8x8xf32>
    %71 = tpu.matmul %68, %69, %cst_30 {dimension_numbers = #tpu.dot_dimension_numbers<[1], [1], [0], [0], [0, 0, 1, 0], [], []>} : vector<8x8xbf16>, vector<8x8xbf16>, vector<8x8xf32> -> vector<8x8xf32>
    %cst_31 = arith.constant dense<0xFF800000> : vector<8xf32>
    %72 = vector.multi_reduction <maximumf>, %71, %cst_31 [1] : vector<8x8xf32> to vector<8xf32>
    %73 = vector.shape_cast %72 : vector<8xf32> to vector<8x1xf32>
    %74 = vector.broadcast %73 : vector<8x1xf32> to vector<8x8xf32>
    %75 = arith.subf %71, %74 : vector<8x8xf32>
    %76 = math.exp %75 : vector<8x8xf32>
    %cst_32 = arith.constant dense<0.000000e+00> : vector<8xf32>
    %77 = vector.multi_reduction <add>, %76, %cst_32 [1] : vector<8x8xf32> to vector<8xf32>
    %78 = vector.shape_cast %77 : vector<8xf32> to vector<8x1xf32>
    %79 = tpu.reciprocal %78 : vector<8x1xf32> -> vector<8x1xf32>
    %80 = vector.broadcast %79 : vector<8x1xf32> to vector<8x8xf32>
    %81 = arith.mulf %76, %80 : vector<8x8xf32>
    %82 = arith.truncf %81 : vector<8x8xf32> to vector<8x8xbf16>
    %cst_33 = arith.constant dense<0.000000e+00> : vector<8x8xf32>
    %83 = tpu.matmul %82, %70, %cst_33 {dimension_numbers = #tpu.dot_dimension_numbers<[1], [0], [0], [1], [0, 0, 1, 1], [], []>} : vector<8x8xbf16>, vector<8x8xbf16>, vector<8x8xf32> -> vector<8x8xf32>
    %c0_34 = arith.constant 0 : index
    %c24 = arith.constant 24 : index
    %84 = vector.load %arg25[%c0_34, %c24] : memref<8x32xf32, #tpu.memory_space<vmem>>, vector<8x8xf32>
    tpu.vector_store %arg25[%c0_34, %c24], %83 {strides = array<i32>} : memref<8x32xf32, #tpu.memory_space<vmem>>, vector<8x8xf32>,
    %c0_35 = arith.constant 0 : index
    %c0_36 = arith.constant 0 : index
    %85 = vector.load %arg25[%c0_35, %c0_36] : memref<8x32xf32, #tpu.memory_space<vmem>>, vector<8x32xf32>
    %86 = arith.truncf %85 : vector<8x32xf32> to vector<8x32xbf16>
    %c0_37 = arith.constant 0 : index
    %c0_38 = arith.constant 0 : index
    %87 = vector.load %arg12[%c0_37, %c0_38] : memref<32x32xbf16, #tpu.memory_space<vmem>>, vector<32x32xbf16>
    %cst_39 = arith.constant dense<0.000000e+00> : vector<8x32xf32>
    %88 = tpu.matmul %86, %87, %cst_39 {dimension_numbers = #tpu.dot_dimension_numbers<[1], [0], [0], [1], [0, 0, 1, 1], [], []>} : vector<8x32xbf16>, vector<32x32xbf16>, vector<8x32xf32> -> vector<8x32xf32>
    %c0_40 = arith.constant 0 : index
    %c0_41 = arith.constant 0 : index
    %89 = vector.load %arg13[%c0_40, %c0_41] : memref<1x32xf32, #tpu.memory_space<vmem>>, vector<1x32xf32>
    %90 = vector.broadcast %89 : vector<1x32xf32> to vector<8x32xf32>
    %91 = arith.addf %88, %90 : vector<8x32xf32>
    %92 = arith.addf %4, %91 : vector<8x32xf32>
    %c0_42 = arith.constant 0 : index
    %c0_43 = arith.constant 0 : index
    %93 = vector.load %arg14[%c0_42, %c0_43] : memref<1x32xf32, #tpu.memory_space<vmem>>, vector<1x32xf32>
    %c0_44 = arith.constant 0 : index
    %c0_45 = arith.constant 0 : index
    %94 = vector.load %arg15[%c0_44, %c0_45] : memref<1x32xf32, #tpu.memory_space<vmem>>, vector<1x32xf32>
    %cst_46 = arith.constant dense<0.000000e+00> : vector<8xf32>
    %95 = vector.multi_reduction <add>, %92, %cst_46 [1] : vector<8x32xf32> to vector<8xf32>
    %96 = vector.shape_cast %95 : vector<8xf32> to vector<8x1xf32>
    %cst_47 = arith.constant 3.200000e+01 : f32
    %97 = vector.broadcast %cst_47 : f32 to vector<8x1xf32>
    %98 = arith.divf %96, %97 : vector<8x1xf32>
    %99 = vector.broadcast %98 : vector<8x1xf32> to vector<8x32xf32>
    %100 = arith.subf %92, %99 : vector<8x32xf32>
    %101 = arith.mulf %100, %100 : vector<8x32xf32>
    %cst_48 = arith.constant dense<0.000000e+00> : vector<8xf32>
    %102 = vector.multi_reduction <add>, %101, %cst_48 [1] : vector<8x32xf32> to vector<8xf32>
    %103 = vector.shape_cast %102 : vector<8xf32> to vector<8x1xf32>
    %cst_49 = arith.constant 3.200000e+01 : f32
    %104 = vector.broadcast %cst_49 : f32 to vector<8x1xf32>
    %105 = arith.divf %103, %104 : vector<8x1xf32>
    %106 = vector.broadcast %98 : vector<8x1xf32> to vector<8x32xf32>
    %107 = arith.subf %92, %106 : vector<8x32xf32>
    %cst_50 = arith.constant 9.99999974E-6 : f32
    %108 = vector.broadcast %cst_50 : f32 to vector<8x1xf32>
    %109 = arith.addf %105, %108 : vector<8x1xf32>
    %110 = math.rsqrt %109 : vector<8x1xf32>
    %111 = vector.broadcast %110 : vector<8x1xf32> to vector<8x32xf32>
    %112 = arith.mulf %107, %111 : vector<8x32xf32>
    %113 = vector.broadcast %93 : vector<1x32xf32> to vector<8x32xf32>
    %114 = arith.mulf %112, %113 : vector<8x32xf32>
    %115 = vector.broadcast %94 : vector<1x32xf32> to vector<8x32xf32>
    %116 = arith.addf %114, %115 : vector<8x32xf32>
    %117 = arith.truncf %116 : vector<8x32xf32> to vector<8x32xbf16>
    %c0_51 = arith.constant 0 : index
    %c0_52 = arith.constant 0 : index
    %118 = vector.load %arg16[%c0_51, %c0_52] : memref<32x64xbf16, #tpu.memory_space<vmem>>, vector<32x64xbf16>
    %cst_53 = arith.constant dense<0.000000e+00> : vector<8x64xf32>
    %119 = tpu.matmul %117, %118, %cst_53 {dimension_numbers = #tpu.dot_dimension_numbers<[1], [0], [0], [1], [0, 0, 1, 1], [], []>} : vector<8x32xbf16>, vector<32x64xbf16>, vector<8x64xf32> -> vector<8x64xf32>
    %c0_54 = arith.constant 0 : index
    %c0_55 = arith.constant 0 : index
    %120 = vector.load %arg17[%c0_54, %c0_55] : memref<1x64xf32, #tpu.memory_space<vmem>>, vector<1x64xf32>
    %121 = vector.broadcast %120 : vector<1x64xf32> to vector<8x64xf32>
    %122 = arith.addf %119, %121 : vector<8x64xf32>
    %cst_56 = arith.constant 0.000000e+00 : f32
    %123 = vector.broadcast %cst_56 : f32 to vector<8x64xf32>
    %124 = arith.maximumf %122, %123 : vector<8x64xf32>
    %125 = arith.truncf %124 : vector<8x64xf32> to vector<8x64xbf16>
    %c0_57 = arith.constant 0 : index
    %c0_58 = arith.constant 0 : index
    %126 = vector.load %arg18[%c0_57, %c0_58] : memref<64x32xbf16, #tpu.memory_space<vmem>>, vector<64x32xbf16>
    %cst_59 = arith.constant dense<0.000000e+00> : vector<8x32xf32>
    %127 = tpu.matmul %125, %126, %cst_59 {dimension_numbers = #tpu.dot_dimension_numbers<[1], [0], [0], [1], [0, 0, 1, 1], [], []>} : vector<8x64xbf16>, vector<64x32xbf16>, vector<8x32xf32> -> vector<8x32xf32>
    %c0_60 = arith.constant 0 : index
    %c0_61 = arith.constant 0 : index
    %128 = vector.load %arg19[%c0_60, %c0_61] : memref<1x32xf32, #tpu.memory_space<vmem>>, vector<1x32xf32>
    %129 = vector.broadcast %128 : vector<1x32xf32> to vector<8x32xf32>
    %130 = arith.addf %127, %129 : vector<8x32xf32>
    %131 = arith.addf %116, %130 : vector<8x32xf32>
    %c0_62 = arith.constant 0 : index
    %c0_63 = arith.constant 0 : index
    %132 = vector.load %arg20[%c0_62, %c0_63] : memref<1x32xf32, #tpu.memory_space<vmem>>, vector<1x32xf32>
    %c0_64 = arith.constant 0 : index
    %c0_65 = arith.constant 0 : index
    %133 = vector.load %arg21[%c0_64, %c0_65] : memref<1x32xf32, #tpu.memory_space<vmem>>, vector<1x32xf32>
    %cst_66 = arith.constant dense<0.000000e+00> : vector<8xf32>
    %134 = vector.multi_reduction <add>, %131, %cst_66 [1] : vector<8x32xf32> to vector<8xf32>
    %135 = vector.shape_cast %134 : vector<8xf32> to vector<8x1xf32>
    %cst_67 = arith.constant 3.200000e+01 : f32
    %136 = vector.broadcast %cst_67 : f32 to vector<8x1xf32>
    %137 = arith.divf %135, %136 : vector<8x1xf32>
    %138 = vector.broadcast %137 : vector<8x1xf32> to vector<8x32xf32>
    %139 = arith.subf %131, %138 : vector<8x32xf32>
    %140 = arith.mulf %139, %139 : vector<8x32xf32>
    %cst_68 = arith.constant dense<0.000000e+00> : vector<8xf32>
    %141 = vector.multi_reduction <add>, %140, %cst_68 [1] : vector<8x32xf32> to vector<8xf32>
    %142 = vector.shape_cast %141 : vector<8xf32> to vector<8x1xf32>
    %cst_69 = arith.constant 3.200000e+01 : f32
    %143 = vector.broadcast %cst_69 : f32 to vector<8x1xf32>
    %144 = arith.divf %142, %143 : vector<8x1xf32>
    %145 = vector.broadcast %137 : vector<8x1xf32> to vector<8x32xf32>
    %146 = arith.subf %131, %145 : vector<8x32xf32>
    %cst_70 = arith.constant 9.99999974E-6 : f32
    %147 = vector.broadcast %cst_70 : f32 to vector<8x1xf32>
    %148 = arith.addf %144, %147 : vector<8x1xf32>
    %149 = math.rsqrt %148 : vector<8x1xf32>
    %150 = vector.broadcast %149 : vector<8x1xf32> to vector<8x32xf32>
    %151 = arith.mulf %146, %150 : vector<8x32xf32>
    %152 = vector.broadcast %132 : vector<1x32xf32> to vector<8x32xf32>
    %153 = arith.mulf %151, %152 : vector<8x32xf32>
    %154 = vector.broadcast %133 : vector<1x32xf32> to vector<8x32xf32>
    %155 = arith.addf %153, %154 : vector<8x32xf32>
    %c0_71 = arith.constant 0 : index
    %c0_72 = arith.constant 0 : index
    %c0_73 = arith.constant 0 : index
    %156 = vector.load %arg22[%c0_71, %c0_72, %c0_73] : memref<1x8x32xf32, #tpu.memory_space<vmem>>, vector<1x8x32xf32>
    %157 = vector.shape_cast %156 : vector<1x8x32xf32> to vector<8x32xf32>
    %158 = vector.shape_cast %155 : vector<8x32xf32> to vector<1x8x32xf32>
    tpu.vector_store %arg22[%c0_71, %c0_72, %c0_73], %158 {strides = array<i32>} : memref<1x8x32xf32, #tpu.memory_space<vmem>>, vector<1x8x32xf32>,
    return
  }
  func.func @transform_0(%arg0: i32, %arg1: i32) -> (i32, i32, i32) {
    %c0_i32 = arith.constant 0 : i32
    %c0_i32_0 = arith.constant 0 : i32
    %c0_i32_1 = arith.constant 0 : i32
    return %arg0, %c0_i32, %c0_i32_0 : i32, i32, i32
  }
  func.func @transform_1(%arg0: i32, %arg1: i32) -> (i32, i32, i32) {
    %c0_i32 = arith.constant 0 : i32
    %c0_i32_0 = arith.constant 0 : i32
    %c0_i32_1 = arith.constant 0 : i32
    return %arg0, %c0_i32, %c0_i32_0 : i32, i32, i32
  }
  func.func @transform_2(%arg0: i32, %arg1: i32) -> (i32, i32, i32) {
    %c0_i32 = arith.constant 0 : i32
    %c0_i32_0 = arith.constant 0 : i32
    return %arg0, %arg1, %c0_i32 : i32, i32, i32
  }
  func.func @transform_3(%arg0: i32, %arg1: i32) -> (i32, i32, i32) {
    %c0_i32 = arith.constant 0 : i32
    %c0_i32_0 = arith.constant 0 : i32
    return %arg0, %arg1, %c0_i32 : i32, i32, i32
  }
  func.func @transform_4(%arg0: i32, %arg1: i32) -> (i32, i32) {
    %c0_i32 = arith.constant 0 : i32
    %c0_i32_0 = arith.constant 0 : i32
    %c0_i32_1 = arith.constant 0 : i32
    return %c0_i32, %c0_i32_0 : i32, i32
  }
  func.func @transform_5(%arg0: i32, %arg1: i32) -> (i32, i32) {
    %c0_i32 = arith.constant 0 : i32
    %c0_i32_0 = arith.constant 0 : i32
    %c0_i32_1 = arith.constant 0 : i32
    return %c0_i32, %c0_i32_0 : i32, i32
  }
  func.func @transform_6(%arg0: i32, %arg1: i32) -> (i32, i32) {
    %c0_i32 = arith.constant 0 : i32
    %c0_i32_0 = arith.constant 0 : i32
    %c0_i32_1 = arith.constant 0 : i32
    return %c0_i32, %c0_i32_0 : i32, i32
  }
  func.func @transform_7(%arg0: i32, %arg1: i32) -> (i32, i32) {
    %c0_i32 = arith.constant 0 : i32
    %c0_i32_0 = arith.constant 0 : i32
    %c0_i32_1 = arith.constant 0 : i32
    return %c0_i32, %c0_i32_0 : i32, i32
  }
  func.func @transform_8(%arg0: i32, %arg1: i32) -> (i32, i32) {
    %c0_i32 = arith.constant 0 : i32
    %c0_i32_0 = arith.constant 0 : i32
    %c0_i32_1 = arith.constant 0 : i32
    return %c0_i32, %c0_i32_0 : i32, i32
  }
  func.func @transform_9(%arg0: i32, %arg1: i32) -> (i32, i32) {
    %c0_i32 = arith.constant 0 : i32
    %c0_i32_0 = arith.constant 0 : i32
    %c0_i32_1 = arith.constant 0 : i32
    return %c0_i32, %c0_i32_0 : i32, i32
  }
  func.func @transform_10(%arg0: i32, %arg1: i32) -> (i32, i32) {
    %c0_i32 = arith.constant 0 : i32
    %c0_i32_0 = arith.constant 0 : i32
    %c0_i32_1 = arith.constant 0 : i32
    return %c0_i32, %c0_i32_0 : i32, i32
  }
  func.func @transform_11(%arg0: i32, %arg1: i32) -> (i32, i32) {
    %c0_i32 = arith.constant 0 : i32
    %c0_i32_0 = arith.constant 0 : i32
    %c0_i32_1 = arith.constant 0 : i32
    return %c0_i32, %c0_i32_0 : i32, i32
  }
  func.func @transform_12(%arg0: i32, %arg1: i32) -> (i32, i32) {
    %c0_i32 = arith.constant 0 : i32
    %c0_i32_0 = arith.constant 0 : i32
    %c0_i32_1 = arith.constant 0 : i32
    return %c0_i32, %c0_i32_0 : i32, i32
  }
  func.func @transform_13(%arg0: i32, %arg1: i32) -> (i32, i32) {
    %c0_i32 = arith.constant 0 : i32
    %c0_i32_0 = arith.constant 0 : i32
    %c0_i32_1 = arith.constant 0 : i32
    return %c0_i32, %c0_i32_0 : i32, i32
  }
  func.func @transform_14(%arg0: i32, %arg1: i32) -> (i32, i32) {
    %c0_i32 = arith.constant 0 : i32
    %c0_i32_0 = arith.constant 0 : i32
    %c0_i32_1 = arith.constant 0 : i32
    return %c0_i32, %c0_i32_0 : i32, i32
  }
  func.func @transform_15(%arg0: i32, %arg1: i32) -> (i32, i32) {
    %c0_i32 = arith.constant 0 : i32
    %c0_i32_0 = arith.constant 0 : i32
    %c0_i32_1 = arith.constant 0 : i32
    return %c0_i32, %c0_i32_0 : i32, i32
  }
  func.func @transform_16(%arg0: i32, %arg1: i32) -> (i32, i32) {
    %c0_i32 = arith.constant 0 : i32
    %c0_i32_0 = arith.constant 0 : i32
    %c0_i32_1 = arith.constant 0 : i32
    return %c0_i32, %c0_i32_0 : i32, i32
  }
  func.func @transform_17(%arg0: i32, %arg1: i32) -> (i32, i32) {
    %c0_i32 = arith.constant 0 : i32
    %c0_i32_0 = arith.constant 0 : i32
    %c0_i32_1 = arith.constant 0 : i32
    return %c0_i32, %c0_i32_0 : i32, i32
  }
  func.func @transform_18(%arg0: i32, %arg1: i32) -> (i32, i32) {
    %c0_i32 = arith.constant 0 : i32
    %c0_i32_0 = arith.constant 0 : i32
    %c0_i32_1 = arith.constant 0 : i32
    return %c0_i32, %c0_i32_0 : i32, i32
  }
  func.func @transform_19(%arg0: i32, %arg1: i32) -> (i32, i32) {
    %c0_i32 = arith.constant 0 : i32
    %c0_i32_0 = arith.constant 0 : i32
    %c0_i32_1 = arith.constant 0 : i32
    return %c0_i32, %c0_i32_0 : i32, i32
  }
  func.func @transform_20(%arg0: i32, %arg1: i32) -> (i32, i32, i32) {
    %c0_i32 = arith.constant 0 : i32
    %c0_i32_0 = arith.constant 0 : i32
    return %arg0, %arg1, %c0_i32 : i32, i32, i32
  }
}

</mosaic_0001>

<llo_original>
// kernel: tpu_custom_call.1
$region0: #{tpu_custom_call.1}
  #allocation0 [shape = 'u32[]', space=smem, size = 0x4, offset = 0x4, fixed_abs, tag = 'smem constant byte address 0x4 - core index']
  #allocation1 [shape = 'u32[144,128]{1,0:T(1,128)}', space=vmem, size = 0x12000, scoped, tag = 'internal scratch']
  #allocation2 [shape = 'bf16[8,32]{1,0:T(8,128)(2,1)}', space=vmem, size = 0x800, scoped, tag = 'scratch operand']
  #allocation3 [shape = 'bf16[8,32]{1,0:T(8,128)(2,1)}', space=vmem, size = 0x800, scoped, tag = 'scratch operand']
  #allocation4 [shape = 'f32[8,32]{1,0:T(8,128)}', space=vmem, size = 0x1000, scoped, tag = 'scratch operand']
  %s0 = inlined_call_operand.vmem [shape: f32[2,8,32], index: 0, kind: input, shape index: {}]
  %s1 = inlined_call_operand.vmem [shape: f32[2,8,32], index: 1, kind: input, shape index: {}]
  %s2 = inlined_call_operand.vmem [shape: f32[2,8,32], index: 2, kind: input, shape index: {}]
  %s3 = inlined_call_operand.hbm [shape: f32[2,8,32], index: 3, kind: input, shape index: {}]
  %s4 = inlined_call_operand.hbm [shape: bf16[32,32], index: 4, kind: input, shape index: {}]
  %s5 = inlined_call_operand.hbm [shape: bf16[32,32], index: 5, kind: input, shape index: {}]
  %s6 = inlined_call_operand.hbm [shape: bf16[32,32], index: 6, kind: input, shape index: {}]
  %s7 = inlined_call_operand.vmem [shape: f32[1,32], index: 7, kind: input, shape index: {}]
  %s8 = inlined_call_operand.vmem [shape: f32[1,32], index: 8, kind: input, shape index: {}]
  %s9 = inlined_call_operand.vmem [shape: f32[1,32], index: 9, kind: input, shape index: {}]
  %s10 = inlined_call_operand.hbm [shape: bf16[32,32], index: 10, kind: input, shape index: {}]
  %s11 = inlined_call_operand.vmem [shape: f32[1,32], index: 11, kind: input, shape index: {}]
  %s12 = inlined_call_operand.vmem [shape: f32[1,32], index: 12, kind: input, shape index: {}]
  %s13 = inlined_call_operand.vmem [shape: f32[1,32], index: 13, kind: input, shape index: {}]
  %s14 = inlined_call_operand.hbm [shape: bf16[32,64], index: 14, kind: input, shape index: {}]
  %s15 = inlined_call_operand.vmem [shape: f32[1,64], index: 15, kind: input, shape index: {}]
  %s16 = inlined_call_operand.vmem [shape: bf16[64,32], index: 16, kind: input, shape index: {}]
  %s17 = inlined_call_operand.vmem [shape: f32[1,32], index: 17, kind: input, shape index: {}]
  %s18 = inlined_call_operand.vmem [shape: f32[1,32], index: 18, kind: input, shape index: {}]
  %s19 = inlined_call_operand.vmem [shape: f32[1,32], index: 19, kind: input, shape index: {}]
  %s20 = inlined_call_operand.hbm [shape: f32[2,8,32], index: 20, kind: output, shape index: {}]
  %s21 = sld [smem:[#allocation0]]
  $region141: #{tpu_custom_call.1} parent=0
    _
  %s23 = ssub.s32 1, %s21
  %s24 = scalar_select 0, %s23, %s21
  $region1: #{tpu_custom_call.1} parent=0
    #allocation5 [shape = 'u8[8192]{0}', space=vmem, size = 0x2000, scoped, tag = 'input window, operand 3']
    #allocation6 [shape = 's32[2]{0}', space=sflag, size = 0x8, scoped, tag = 'scoped memory for tpu_custom_call.1']
    #allocation7 [shape = 's32[2]{0}', space=sflag, size = 0x8, scoped, tag = 'scoped memory for tpu_custom_call.1']
    #allocation8 [shape = 'u8[8192]{0}', space=vmem, size = 0x2000, scoped, tag = 'input window, operand 4, single buffered']
    #allocation9 [shape = 's32[1]{0}', space=sflag, size = 0x4, scoped, tag = 'scoped memory for tpu_custom_call.1']
    #allocation10 [shape = 'u8[8192]{0}', space=vmem, size = 0x2000, scoped, tag = 'input window, operand 5, single buffered']
    #allocation11 [shape = 'u8[8192]{0}', space=vmem, size = 0x2000, scoped, tag = 'input window, operand 6, single buffered']
    #allocation12 [shape = 's32[1]{0}', space=sflag, size = 0x4, scoped, tag = 'scoped memory for tpu_custom_call.1']
    #allocation13 [shape = 'u8[8192]{0}', space=vmem, size = 0x2000, scoped, tag = 'input window, operand 10, single buffered']
    #allocation14 [shape = 'u8[8192]{0}', space=vmem, size = 0x2000, scoped, tag = 'input window, operand 14, single buffered']
    #allocation15 [shape = 's32[1]{0}', space=sflag, size = 0x4, scoped, tag = 'scoped memory for tpu_custom_call.1']
    #allocation16 [shape = 'u8[8192]{0}', space=vmem, size = 0x2000, scoped, tag = 'output window, operand 0']
    %25 = vsyncpa [#allocation6], 0
    %s26 = scalar_lea.sflag [#allocation6], 1
    %27 = vsyncpa %s26, 0
    %28 = vsyncpa [#allocation9], 0
    %29 = vsyncpa [#allocation12], 0
    %30 = vsyncpa [#allocation15], 0
    %31 = vsyncpa [#allocation7], 0
    %s32 = scalar_lea.sflag [#allocation7], 1
    %33 = vsyncpa %s32, 0
    loop: start=0, step=1, limit=4
    $region2: #{tpu_custom_call.1} parent=1 // loop_pre_header
      _
    $region3: #{tpu_custom_call.1} parent=1 // loop_header
      %s35 = sphi 0, %s39
      %p36 = scmp.ge.s32.totalorder %s35, 4
      %s42 = sphi 0, %s54
      %s43 = sphi 0, %s50
      %s44 = sphi 0, %s42
      %s45 = sphi 0, %s43
      %s46 = sphi 0, %s44
      %s47 = sphi 0, %s45
      %s57 = sphi 0, %s59
      %s60 = sphi 0, %s57
      %s61 = sphi 0, %s60
      %s77 = sphi 0, %s61
      %s83 = sphi 0, %s85
      %s86 = sphi 0, %s83
      %s87 = sphi 0, %s86
      %s103 = sphi 0, %s87
      %s111 = sphi 0, %s113
      %s114 = sphi 0, %s111
      %s115 = sphi 0, %s114
      %s131 = sphi 0, %s115
      %s139 = sphi 0, %s141
      %s142 = sphi 0, %s139
      %s143 = sphi 0, %s142
      %s159 = sphi 0, %s143
      %s163 = sphi 0, %s163
      %s165 = sphi 0, %s163
      %s166 = sphi 0, %s165
      %s180 = sphi 0, %s166
      %s184 = sphi 0, %s184
      %s186 = sphi 0, %s184
      %s187 = sphi 0, %s186
      %s201 = sphi 0, %s187
      %s205 = sphi 0, %s205
      %s207 = sphi 0, %s205
      %s208 = sphi 0, %s207
      %s222 = sphi 0, %s208
      %s226 = sphi 0, %s226
      %s228 = sphi 0, %s226
      %s229 = sphi 0, %s228
      %s243 = sphi 0, %s229
      %s247 = sphi 0, %s247
      %s249 = sphi 0, %s247
      %s250 = sphi 0, %s249
      %s264 = sphi 0, %s250
      %s268 = sphi 0, %s268
      %s270 = sphi 0, %s268
      %s271 = sphi 0, %s270
      %s285 = sphi 0, %s271
      %s289 = sphi 0, %s289
      %s291 = sphi 0, %s289
      %s292 = sphi 0, %s291
      %s306 = sphi 0, %s292
      %s310 = sphi 0, %s310
      %s312 = sphi 0, %s310
      %s313 = sphi 0, %s312
      %s327 = sphi 0, %s313
      %s331 = sphi 0, %s331
      %s333 = sphi 0, %s331
      %s334 = sphi 0, %s333
      %s348 = sphi 0, %s334
      %s352 = sphi 0, %s352
      %s354 = sphi 0, %s352
      %s355 = sphi 0, %s354
      %s369 = sphi 0, %s355
      %s373 = sphi 0, %s373
      %s375 = sphi 0, %s373
      %s376 = sphi 0, %s375
      %s390 = sphi 0, %s376
      %s394 = sphi 0, %s394
      %s396 = sphi 0, %s394
      %s397 = sphi 0, %s396
      %s411 = sphi 0, %s397
      %s415 = sphi 0, %s415
      %s417 = sphi 0, %s415
      %s418 = sphi 0, %s417
      %s432 = sphi 0, %s418
      %s436 = sphi 0, %s436
      %s438 = sphi 0, %s436
      %s439 = sphi 0, %s438
      %s453 = sphi 0, %s439
      %s457 = sphi 0, %s457
      %s459 = sphi 0, %s457
      %s460 = sphi 0, %s459
      %s474 = sphi 0, %s460
      %s478 = sphi 0, %s478
      %s480 = sphi 0, %s478
      %s481 = sphi 0, %s480
      %s495 = sphi 0, %s481
      %s503 = sphi 0, %s505
      %s506 = sphi 0, %s503
      %s507 = sphi 0, %s506
      %s523 = sphi 0, %s507
    $region4: #{tpu_custom_call.1} parent=1 // loop_header_branch
      %38 = sbr.rel (%p36) target = $region8
    $region5: #{tpu_custom_call.1} parent=1 // loop_body
      %s40 = ssub.s32 %s35, 1
      %s41 = ssub.s32 %s35, 2
      %s48 = sadd.s32 1, %s43
      %p49 = scmp.ge.s32.totalorder %s48, 1
      %s50 = scalar_select %p49, 0, %s48
      %s51 = sadd.s32 1, %s42
      %s52 = scalar_select %p49, %s51, %s42
      %p53 = scmp.ge.s32.totalorder %s52, 2
      %s54 = scalar_select %p53, 0, %s52
      %s55 = ssub.s32 %s42, %s54
      %p56 = scmp.eq.s32.totalorder %s55, 0
      %s58 = sadd.s32 %s57, 1
      %s59 = scalar_select %p56, %s57, %s58
      %p62 = pneg %p56
      %p63 = scmp.eq.s32.totalorder %s35, 1
      %p64 = por %p62, %p63
      %p65 = scmp.ne.s32.totalorder %s57, %s60
      %p66 = scmp.eq.s32.totalorder %s35, 0
      %p67 = por %p65, %p66
      %p68 = scmp.ne.s32.totalorder %s57, %s60
      %p69 = scmp.eq.s32.totalorder %s40, 1
      %p70 = por %p68, %p69
      %p71 = scmp.ne.s32.totalorder %s60, %s61
      %p72 = scmp.eq.s32.totalorder %s40, 0
      %p73 = por %p71, %p72
      %p74 = scmp.ne.s32.totalorder %s60, %s61
      %p75 = scmp.eq.s32.totalorder %s41, 1
      %p76 = por %p74, %p75
      %p78 = scmp.ne.s32.totalorder %s61, %s77
      %p79 = scmp.eq.s32.totalorder %s41, 0
      %p80 = por %p78, %p79
      %s81 = ssub.s32 %s42, %s54
      %p82 = scmp.eq.s32.totalorder %s81, 0
      %s84 = sadd.s32 %s83, 1
      %s85 = scalar_select %p82, %s83, %s84
      %p88 = pneg %p82
      %p89 = scmp.eq.s32.totalorder %s35, 1
      %p90 = por %p88, %p89
      %p91 = scmp.ne.s32.totalorder %s83, %s86
      %p92 = scmp.eq.s32.totalorder %s35, 0
      %p93 = por %p91, %p92
      %p94 = scmp.ne.s32.totalorder %s83, %s86
      %p95 = scmp.eq.s32.totalorder %s40, 1
      %p96 = por %p94, %p95
      %p97 = scmp.ne.s32.totalorder %s86, %s87
      %p98 = scmp.eq.s32.totalorder %s40, 0
      %p99 = por %p97, %p98
      %p100 = scmp.ne.s32.totalorder %s86, %s87
      %p101 = scmp.eq.s32.totalorder %s41, 1
      %p102 = por %p100, %p101
      %p104 = scmp.ne.s32.totalorder %s87, %s103
      %p105 = scmp.eq.s32.totalorder %s41, 0
      %p106 = por %p104, %p105
      %s107 = ssub.s32 %s42, %s54
      %s108 = ssub.s32 %s43, %s50
      %s109 = sor.u32 %s107, %s108
      %p110 = scmp.eq.s32.totalorder %s109, 0
      %s112 = sadd.s32 %s111, 1
      %s113 = scalar_select %p110, %s111, %s112
      %p116 = pneg %p110
      %p117 = scmp.eq.s32.totalorder %s35, 1
      %p118 = por %p116, %p117
      %p119 = scmp.ne.s32.totalorder %s111, %s114
      %p120 = scmp.eq.s32.totalorder %s35, 0
      %p121 = por %p119, %p120
      %p122 = scmp.ne.s32.totalorder %s111, %s114
      %p123 = scmp.eq.s32.totalorder %s40, 1
      %p124 = por %p122, %p123
      %p125 = scmp.ne.s32.totalorder %s114, %s115
      %p126 = scmp.eq.s32.totalorder %s40, 0
      %p127 = por %p125, %p126
      %p128 = scmp.ne.s32.totalorder %s114, %s115
      %p129 = scmp.eq.s32.totalorder %s41, 1
      %p130 = por %p128, %p129
      %p132 = scmp.ne.s32.totalorder %s115, %s131
      %p133 = scmp.eq.s32.totalorder %s41, 0
      %p134 = por %p132, %p133
      %s135 = ssub.s32 %s42, %s54
      %s136 = ssub.s32 %s43, %s50
      %s137 = sor.u32 %s135, %s136
      %p138 = scmp.eq.s32.totalorder %s137, 0
      %s140 = sadd.s32 %s139, 1
      %s141 = scalar_select %p138, %s139, %s140
      %p144 = pneg %p138
      %p145 = scmp.eq.s32.totalorder %s35, 1
      %p146 = por %p144, %p145
      %p147 = scmp.ne.s32.totalorder %s139, %s142
      %p148 = scmp.eq.s32.totalorder %s35, 0
      %p149 = por %p147, %p148
      %p150 = scmp.ne.s32.totalorder %s139, %s142
      %p151 = scmp.eq.s32.totalorder %s40, 1
      %p152 = por %p150, %p151
      %p153 = scmp.ne.s32.totalorder %s142, %s143
      %p154 = scmp.eq.s32.totalorder %s40, 0
      %p155 = por %p153, %p154
      %p156 = scmp.ne.s32.totalorder %s142, %s143
      %p157 = scmp.eq.s32.totalorder %s41, 1
      %p158 = por %p156, %p157
      %p160 = scmp.ne.s32.totalorder %s143, %s159
      %p161 = scmp.eq.s32.totalorder %s41, 0
      %p162 = por %p160, %p161
      %s164 = sadd.s32 %s163, 1
      %p167 = scmp.eq.s32.totalorder %s35, 1
      %p168 = scmp.ne.s32.totalorder %s163, %s165
      %p169 = scmp.eq.s32.totalorder %s35, 0
      %p170 = por %p168, %p169
      %p171 = scmp.ne.s32.totalorder %s163, %s165
      %p172 = scmp.eq.s32.totalorder %s40, 1
      %p173 = por %p171, %p172
      %p174 = scmp.ne.s32.totalorder %s165, %s166
      %p175 = scmp.eq.s32.totalorder %s40, 0
      %p176 = por %p174, %p175
      %p177 = scmp.ne.s32.totalorder %s165, %s166
      %p178 = scmp.eq.s32.totalorder %s41, 1
      %p179 = por %p177, %p178
      %p181 = scmp.ne.s32.totalorder %s166, %s180
      %p182 = scmp.eq.s32.totalorder %s41, 0
      %p183 = por %p181, %p182
      %s185 = sadd.s32 %s184, 1
      %p188 = scmp.eq.s32.totalorder %s35, 1
      %p189 = scmp.ne.s32.totalorder %s184, %s186
      %p190 = scmp.eq.s32.totalorder %s35, 0
      %p191 = por %p189, %p190
      %p192 = scmp.ne.s32.totalorder %s184, %s186
      %p193 = scmp.eq.s32.totalorder %s40, 1
      %p194 = por %p192, %p193
      %p195 = scmp.ne.s32.totalorder %s186, %s187
      %p196 = scmp.eq.s32.totalorder %s40, 0
      %p197 = por %p195, %p196
      %p198 = scmp.ne.s32.totalorder %s186, %s187
      %p199 = scmp.eq.s32.totalorder %s41, 1
      %p200 = por %p198, %p199
      %p202 = scmp.ne.s32.totalorder %s187, %s201
      %p203 = scmp.eq.s32.totalorder %s41, 0
      %p204 = por %p202, %p203
      %s206 = sadd.s32 %s205, 1
      %p209 = scmp.eq.s32.totalorder %s35, 1
      %p210 = scmp.ne.s32.totalorder %s205, %s207
      %p211 = scmp.eq.s32.totalorder %s35, 0
      %p212 = por %p210, %p211
      %p213 = scmp.ne.s32.totalorder %s205, %s207
      %p214 = scmp.eq.s32.totalorder %s40, 1
      %p215 = por %p213, %p214
      %p216 = scmp.ne.s32.totalorder %s207, %s208
      %p217 = scmp.eq.s32.totalorder %s40, 0
      %p218 = por %p216, %p217
      %p219 = scmp.ne.s32.totalorder %s207, %s208
      %p220 = scmp.eq.s32.totalorder %s41, 1
      %p221 = por %p219, %p220
      %p223 = scmp.ne.s32.totalorder %s208, %s222
      %p224 = scmp.eq.s32.totalorder %s41, 0
      %p225 = por %p223, %p224
      %s227 = sadd.s32 %s226, 1
      %p230 = scmp.eq.s32.totalorder %s35, 1
      %p231 = scmp.ne.s32.totalorder %s226, %s228
      %p232 = scmp.eq.s32.totalorder %s35, 0
      %p233 = por %p231, %p232
      %p234 = scmp.ne.s32.totalorder %s226, %s228
      %p235 = scmp.eq.s32.totalorder %s40, 1
      %p236 = por %p234, %p235
      %p237 = scmp.ne.s32.totalorder %s228, %s229
      %p238 = scmp.eq.s32.totalorder %s40, 0
      %p239 = por %p237, %p238
      %p240 = scmp.ne.s32.totalorder %s228, %s229
      %p241 = scmp.eq.s32.totalorder %s41, 1
      %p242 = por %p240, %p241
      %p244 = scmp.ne.s32.totalorder %s229, %s243
      %p245 = scmp.eq.s32.totalorder %s41, 0
      %p246 = por %p244, %p245
      %s248 = sadd.s32 %s247, 1
      %p251 = scmp.eq.s32.totalorder %s35, 1
      %p252 = scmp.ne.s32.totalorder %s247, %s249
      %p253 = scmp.eq.s32.totalorder %s35, 0
      %p254 = por %p252, %p253
      %p255 = scmp.ne.s32.totalorder %s247, %s249
      %p256 = scmp.eq.s32.totalorder %s40, 1
      %p257 = por %p255, %p256
      %p258 = scmp.ne.s32.totalorder %s249, %s250
      %p259 = scmp.eq.s32.totalorder %s40, 0
      %p260 = por %p258, %p259
      %p261 = scmp.ne.s32.totalorder %s249, %s250
      %p262 = scmp.eq.s32.totalorder %s41, 1
      %p263 = por %p261, %p262
      %p265 = scmp.ne.s32.totalorder %s250, %s264
      %p266 = scmp.eq.s32.totalorder %s41, 0
      %p267 = por %p265, %p266
      %s269 = sadd.s32 %s268, 1
      %p272 = scmp.eq.s32.totalorder %s35, 1
      %p273 = scmp.ne.s32.totalorder %s268, %s270
      %p274 = scmp.eq.s32.totalorder %s35, 0
      %p275 = por %p273, %p274
      %p276 = scmp.ne.s32.totalorder %s268, %s270
      %p277 = scmp.eq.s32.totalorder %s40, 1
      %p278 = por %p276, %p277
      %p279 = scmp.ne.s32.totalorder %s270, %s271
      %p280 = scmp.eq.s32.totalorder %s40, 0
      %p281 = por %p279, %p280
      %p282 = scmp.ne.s32.totalorder %s270, %s271
      %p283 = scmp.eq.s32.totalorder %s41, 1
      %p284 = por %p282, %p283
      %p286 = scmp.ne.s32.totalorder %s271, %s285
      %p287 = scmp.eq.s32.totalorder %s41, 0
      %p288 = por %p286, %p287
      %s290 = sadd.s32 %s289, 1
      %p293 = scmp.eq.s32.totalorder %s35, 1
      %p294 = scmp.ne.s32.totalorder %s289, %s291
      %p295 = scmp.eq.s32.totalorder %s35, 0
      %p296 = por %p294, %p295
      %p297 = scmp.ne.s32.totalorder %s289, %s291
      %p298 = scmp.eq.s32.totalorder %s40, 1
      %p299 = por %p297, %p298
      %p300 = scmp.ne.s32.totalorder %s291, %s292
      %p301 = scmp.eq.s32.totalorder %s40, 0
      %p302 = por %p300, %p301
      %p303 = scmp.ne.s32.totalorder %s291, %s292
      %p304 = scmp.eq.s32.totalorder %s41, 1
      %p305 = por %p303, %p304
      %p307 = scmp.ne.s32.totalorder %s292, %s306
      %p308 = scmp.eq.s32.totalorder %s41, 0
      %p309 = por %p307, %p308
      %s311 = sadd.s32 %s310, 1
      %p314 = scmp.eq.s32.totalorder %s35, 1
      %p315 = scmp.ne.s32.totalorder %s310, %s312
      %p316 = scmp.eq.s32.totalorder %s35, 0
      %p317 = por %p315, %p316
      %p318 = scmp.ne.s32.totalorder %s310, %s312
      %p319 = scmp.eq.s32.totalorder %s40, 1
      %p320 = por %p318, %p319
      %p321 = scmp.ne.s32.totalorder %s312, %s313
      %p322 = scmp.eq.s32.totalorder %s40, 0
      %p323 = por %p321, %p322
      %p324 = scmp.ne.s32.totalorder %s312, %s313
      %p325 = scmp.eq.s32.totalorder %s41, 1
      %p326 = por %p324, %p325
      %p328 = scmp.ne.s32.totalorder %s313, %s327
      %p329 = scmp.eq.s32.totalorder %s41, 0
      %p330 = por %p328, %p329
      %s332 = sadd.s32 %s331, 1
      %p335 = scmp.eq.s32.totalorder %s35, 1
      %p336 = scmp.ne.s32.totalorder %s331, %s333
      %p337 = scmp.eq.s32.totalorder %s35, 0
      %p338 = por %p336, %p337
      %p339 = scmp.ne.s32.totalorder %s331, %s333
      %p340 = scmp.eq.s32.totalorder %s40, 1
      %p341 = por %p339, %p340
      %p342 = scmp.ne.s32.totalorder %s333, %s334
      %p343 = scmp.eq.s32.totalorder %s40, 0
      %p344 = por %p342, %p343
      %p345 = scmp.ne.s32.totalorder %s333, %s334
      %p346 = scmp.eq.s32.totalorder %s41, 1
      %p347 = por %p345, %p346
      %p349 = scmp.ne.s32.totalorder %s334, %s348
      %p350 = scmp.eq.s32.totalorder %s41, 0
      %p351 = por %p349, %p350
      %s353 = sadd.s32 %s352, 1
      %p356 = scmp.eq.s32.totalorder %s35, 1
      %p357 = scmp.ne.s32.totalorder %s352, %s354
      %p358 = scmp.eq.s32.totalorder %s35, 0
      %p359 = por %p357, %p358
      %p360 = scmp.ne.s32.totalorder %s352, %s354
      %p361 = scmp.eq.s32.totalorder %s40, 1
      %p362 = por %p360, %p361
      %p363 = scmp.ne.s32.totalorder %s354, %s355
      %p364 = scmp.eq.s32.totalorder %s40, 0
      %p365 = por %p363, %p364
      %p366 = scmp.ne.s32.totalorder %s354, %s355
      %p367 = scmp.eq.s32.totalorder %s41, 1
      %p368 = por %p366, %p367
      %p370 = scmp.ne.s32.totalorder %s355, %s369
      %p371 = scmp.eq.s32.totalorder %s41, 0
      %p372 = por %p370, %p371
      %s374 = sadd.s32 %s373, 1
      %p377 = scmp.eq.s32.totalorder %s35, 1
      %p378 = scmp.ne.s32.totalorder %s373, %s375
      %p379 = scmp.eq.s32.totalorder %s35, 0
      %p380 = por %p378, %p379
      %p381 = scmp.ne.s32.totalorder %s373, %s375
      %p382 = scmp.eq.s32.totalorder %s40, 1
      %p383 = por %p381, %p382
      %p384 = scmp.ne.s32.totalorder %s375, %s376
      %p385 = scmp.eq.s32.totalorder %s40, 0
      %p386 = por %p384, %p385
      %p387 = scmp.ne.s32.totalorder %s375, %s376
      %p388 = scmp.eq.s32.totalorder %s41, 1
      %p389 = por %p387, %p388
      %p391 = scmp.ne.s32.totalorder %s376, %s390
      %p392 = scmp.eq.s32.totalorder %s41, 0
      %p393 = por %p391, %p392
      %s395 = sadd.s32 %s394, 1
      %p398 = scmp.eq.s32.totalorder %s35, 1
      %p399 = scmp.ne.s32.totalorder %s394, %s396
      %p400 = scmp.eq.s32.totalorder %s35, 0
      %p401 = por %p399, %p400
      %p402 = scmp.ne.s32.totalorder %s394, %s396
      %p403 = scmp.eq.s32.totalorder %s40, 1
      %p404 = por %p402, %p403
      %p405 = scmp.ne.s32.totalorder %s396, %s397
      %p406 = scmp.eq.s32.totalorder %s40, 0
      %p407 = por %p405, %p406
      %p408 = scmp.ne.s32.totalorder %s396, %s397
      %p409 = scmp.eq.s32.totalorder %s41, 1
      %p410 = por %p408, %p409
      %p412 = scmp.ne.s32.totalorder %s397, %s411
      %p413 = scmp.eq.s32.totalorder %s41, 0
      %p414 = por %p412, %p413
      %s416 = sadd.s32 %s415, 1
      %p419 = scmp.eq.s32.totalorder %s35, 1
      %p420 = scmp.ne.s32.totalorder %s415, %s417
      %p421 = scmp.eq.s32.totalorder %s35, 0
      %p422 = por %p420, %p421
      %p423 = scmp.ne.s32.totalorder %s415, %s417
      %p424 = scmp.eq.s32.totalorder %s40, 1
      %p425 = por %p423, %p424
      %p426 = scmp.ne.s32.totalorder %s417, %s418
      %p427 = scmp.eq.s32.totalorder %s40, 0
      %p428 = por %p426, %p427
      %p429 = scmp.ne.s32.totalorder %s417, %s418
      %p430 = scmp.eq.s32.totalorder %s41, 1
      %p431 = por %p429, %p430
      %p433 = scmp.ne.s32.totalorder %s418, %s432
      %p434 = scmp.eq.s32.totalorder %s41, 0
      %p435 = por %p433, %p434
      %s437 = sadd.s32 %s436, 1
      %p440 = scmp.eq.s32.totalorder %s35, 1
      %p441 = scmp.ne.s32.totalorder %s436, %s438
      %p442 = scmp.eq.s32.totalorder %s35, 0
      %p443 = por %p441, %p442
      %p444 = scmp.ne.s32.totalorder %s436, %s438
      %p445 = scmp.eq.s32.totalorder %s40, 1
      %p446 = por %p444, %p445
      %p447 = scmp.ne.s32.totalorder %s438, %s439
      %p448 = scmp.eq.s32.totalorder %s40, 0
      %p449 = por %p447, %p448
      %p450 = scmp.ne.s32.totalorder %s438, %s439
      %p451 = scmp.eq.s32.totalorder %s41, 1
      %p452 = por %p450, %p451
      %p454 = scmp.ne.s32.totalorder %s439, %s453
      %p455 = scmp.eq.s32.totalorder %s41, 0
      %p456 = por %p454, %p455
      %s458 = sadd.s32 %s457, 1
      %p461 = scmp.eq.s32.totalorder %s35, 1
      %p462 = scmp.ne.s32.totalorder %s457, %s459
      %p463 = scmp.eq.s32.totalorder %s35, 0
      %p464 = por %p462, %p463
      %p465 = scmp.ne.s32.totalorder %s457, %s459
      %p466 = scmp.eq.s32.totalorder %s40, 1
      %p467 = por %p465, %p466
      %p468 = scmp.ne.s32.totalorder %s459, %s460
      %p469 = scmp.eq.s32.totalorder %s40, 0
      %p470 = por %p468, %p469
      %p471 = scmp.ne.s32.totalorder %s459, %s460
      %p472 = scmp.eq.s32.totalorder %s41, 1
      %p473 = por %p471, %p472
      %p475 = scmp.ne.s32.totalorder %s460, %s474
      %p476 = scmp.eq.s32.totalorder %s41, 0
      %p477 = por %p475, %p476
      %s479 = sadd.s32 %s478, 1
      %p482 = scmp.eq.s32.totalorder %s35, 1
      %p483 = scmp.ne.s32.totalorder %s478, %s480
      %p484 = scmp.eq.s32.totalorder %s35, 0
      %p485 = por %p483, %p484
      %p486 = scmp.ne.s32.totalorder %s478, %s480
      %p487 = scmp.eq.s32.totalorder %s40, 1
      %p488 = por %p486, %p487
      %p489 = scmp.ne.s32.totalorder %s480, %s481
      %p490 = scmp.eq.s32.totalorder %s40, 0
      %p491 = por %p489, %p490
      %p492 = scmp.ne.s32.totalorder %s480, %s481
      %p493 = scmp.eq.s32.totalorder %s41, 1
      %p494 = por %p492, %p493
      %p496 = scmp.ne.s32.totalorder %s481, %s495
      %p497 = scmp.eq.s32.totalorder %s41, 0
      %p498 = por %p496, %p497
      %s499 = ssub.s32 %s42, %s54
      %s500 = ssub.s32 %s43, %s50
      %s501 = sor.u32 %s499, %s500
      %p502 = scmp.eq.s32.totalorder %s501, 0
      %s504 = sadd.s32 %s503, 1
      %s505 = scalar_select %p502, %s503, %s504
      %p508 = pneg %p502
      %p509 = scmp.eq.s32.totalorder %s35, 1
      %p510 = por %p508, %p509
      %p511 = scmp.ne.s32.totalorder %s503, %s506
      %p512 = scmp.eq.s32.totalorder %s35, 0
      %p513 = por %p511, %p512
      %p514 = scmp.ne.s32.totalorder %s503, %s506
      %p515 = scmp.eq.s32.totalorder %s40, 1
      %p516 = por %p514, %p515
      %p517 = scmp.ne.s32.totalorder %s506, %s507
      %p518 = scmp.eq.s32.totalorder %s40, 0
      %p519 = por %p517, %p518
      %p520 = scmp.ne.s32.totalorder %s506, %s507
      %p521 = scmp.eq.s32.totalorder %s41, 1
      %p522 = por %p520, %p521
      %p524 = scmp.ne.s32.totalorder %s507, %s523
      %p525 = scmp.eq.s32.totalorder %s41, 0
      %p526 = por %p524, %p525
      %p527 = scmp.le.s32.totalorder 1, %s35
      %p528 = scmp.lt.s32.totalorder %s35, 3
      %p529 = pnand %p527, %p528
      %p530 = pneg %p529
      // Predicated region
      $region9: #{tpu_custom_call.1} parent=5 // pred_check
        _
      $region10: #{tpu_custom_call.1} parent=5 // pred_check_branch
        %532 = sbr.rel (%p529) target = $region12
      $region11: #{tpu_custom_call.1} parent=5 // pred_region
        %s533 = ssub.s32 %s35, 1
        // Predicated region
        $region13: #{tpu_custom_call.1} parent=11 // pred_check
          %p534 = pneg %p176
        $region14: #{tpu_custom_call.1} parent=11 // pred_check_branch
          %536 = sbr.rel (%p534) target = $region16
        $region15: #{tpu_custom_call.1} parent=11 // pred_region
          %s538 = ssub.s32 256, 256
          %539 = vsyncadd [#allocation9], %s538
          %s540 = sshll.u32 [#allocation8], 4
          %s541 = int_to_ptr.vmem [resolvable:$true] %s540
          %546 = dma.hbm_to_vmem [thread:$0]  %s4, 256, %s541, [#allocation9], 64, 64, 4
        $region16: #{tpu_custom_call.1} parent=11 // pred_fallthru
          _
        // Predicated region
        $region17: #{tpu_custom_call.1} parent=11 // pred_check
          %p547 = pneg %p197
        $region18: #{tpu_custom_call.1} parent=11 // pred_check_branch
          %549 = sbr.rel (%p547) target = $region20
        $region19: #{tpu_custom_call.1} parent=11 // pred_region
          %s551 = ssub.s32 256, 256
          %552 = vsyncadd [#allocation9], %s551
          %s553 = sshll.u32 [#allocation10], 4
          %s554 = int_to_ptr.vmem [resolvable:$true] %s553
          %559 = dma.hbm_to_vmem [thread:$0]  %s5, 256, %s554, [#allocation9], 64, 64, 4
        $region20: #{tpu_custom_call.1} parent=11 // pred_fallthru
          _
        // Predicated region
        $region21: #{tpu_custom_call.1} parent=11 // pred_check
          %p560 = pneg %p218
        $region22: #{tpu_custom_call.1} parent=11 // pred_check_branch
          %562 = sbr.rel (%p560) target = $region24
        $region23: #{tpu_custom_call.1} parent=11 // pred_region
          %s564 = ssub.s32 256, 256
          %565 = vsyncadd [#allocation12], %s564
          %s566 = sshll.u32 [#allocation11], 4
          %s567 = int_to_ptr.vmem [resolvable:$true] %s566
          %572 = dma.hbm_to_vmem [thread:$0]  %s6, 256, %s567, [#allocation12], 64, 64, 4
        $region24: #{tpu_custom_call.1} parent=11 // pred_fallthru
          _
        // Predicated region
        $region25: #{tpu_custom_call.1} parent=11 // pred_check
          %p573 = pneg %p239
        $region26: #{tpu_custom_call.1} parent=11 // pred_check_branch
          %575 = sbr.rel (%p573) target = $region28
        $region27: #{tpu_custom_call.1} parent=11 // pred_region
          _
        $region28: #{tpu_custom_call.1} parent=11 // pred_fallthru
          _
        // Predicated region
        $region29: #{tpu_custom_call.1} parent=11 // pred_check
          %p576 = pneg %p260
        $region30: #{tpu_custom_call.1} parent=11 // pred_check_branch
          %578 = sbr.rel (%p576) target = $region32
        $region31: #{tpu_custom_call.1} parent=11 // pred_region
          _
        $region32: #{tpu_custom_call.1} parent=11 // pred_fallthru
          _
        // Predicated region
        $region33: #{tpu_custom_call.1} parent=11 // pred_check
          %p579 = pneg %p281
        $region34: #{tpu_custom_call.1} parent=11 // pred_check_branch
          %581 = sbr.rel (%p579) target = $region36
        $region35: #{tpu_custom_call.1} parent=11 // pred_region
          _
        $region36: #{tpu_custom_call.1} parent=11 // pred_fallthru
          _
        // Predicated region
        $region37: #{tpu_custom_call.1} parent=11 // pred_check
          %p582 = pneg %p302
        $region38: #{tpu_custom_call.1} parent=11 // pred_check_branch
          %584 = sbr.rel (%p582) target = $region40
        $region39: #{tpu_custom_call.1} parent=11 // pred_region
          %s586 = ssub.s32 256, 256
          %587 = vsyncadd [#allocation12], %s586
          %s588 = sshll.u32 [#allocation13], 4
          %s589 = int_to_ptr.vmem [resolvable:$true] %s588
          %594 = dma.hbm_to_vmem [thread:$0]  %s10, 256, %s589, [#allocation12], 64, 64, 4
        $region40: #{tpu_custom_call.1} parent=11 // pred_fallthru
          _
        // Predicated region
        $region41: #{tpu_custom_call.1} parent=11 // pred_check
          %p595 = pneg %p323
        $region42: #{tpu_custom_call.1} parent=11 // pred_check_branch
          %597 = sbr.rel (%p595) target = $region44
        $region43: #{tpu_custom_call.1} parent=11 // pred_region
          _
        $region44: #{tpu_custom_call.1} parent=11 // pred_fallthru
          _
        // Predicated region
        $region45: #{tpu_custom_call.1} parent=11 // pred_check
          %p598 = pneg %p344
        $region46: #{tpu_custom_call.1} parent=11 // pred_check_branch
          %600 = sbr.rel (%p598) target = $region48
        $region47: #{tpu_custom_call.1} parent=11 // pred_region
          _
        $region48: #{tpu_custom_call.1} parent=11 // pred_fallthru
          _
        // Predicated region
        $region49: #{tpu_custom_call.1} parent=11 // pred_check
          %p601 = pneg %p365
        $region50: #{tpu_custom_call.1} parent=11 // pred_check_branch
          %603 = sbr.rel (%p601) target = $region52
        $region51: #{tpu_custom_call.1} parent=11 // pred_region
          _
        $region52: #{tpu_custom_call.1} parent=11 // pred_fallthru
          _
        // Predicated region
        $region53: #{tpu_custom_call.1} parent=11 // pred_check
          %p604 = pneg %p386
        $region54: #{tpu_custom_call.1} parent=11 // pred_check_branch
          %606 = sbr.rel (%p604) target = $region56
        $region55: #{tpu_custom_call.1} parent=11 // pred_region
          %s608 = ssub.s32 256, 256
          %609 = vsyncadd [#allocation15], %s608
          %s610 = sshll.u32 [#allocation14], 4
          %s611 = int_to_ptr.vmem [resolvable:$true] %s610
          %616 = dma.hbm_to_vmem [thread:$0]  %s14, 256, %s611, [#allocation15], 64, 64, 4
        $region56: #{tpu_custom_call.1} parent=11 // pred_fallthru
          _
        // Predicated region
        $region57: #{tpu_custom_call.1} parent=11 // pred_check
          %p617 = pneg %p407
        $region58: #{tpu_custom_call.1} parent=11 // pred_check_branch
          %619 = sbr.rel (%p617) target = $region60
        $region59: #{tpu_custom_call.1} parent=11 // pred_region
          _
        $region60: #{tpu_custom_call.1} parent=11 // pred_fallthru
          _
        // Predicated region
        $region61: #{tpu_custom_call.1} parent=11 // pred_check
          %p620 = pneg %p428
        $region62: #{tpu_custom_call.1} parent=11 // pred_check_branch
          %622 = sbr.rel (%p620) target = $region64
        $region63: #{tpu_custom_call.1} parent=11 // pred_region
          _
        $region64: #{tpu_custom_call.1} parent=11 // pred_fallthru
          _
        // Predicated region
        $region65: #{tpu_custom_call.1} parent=11 // pred_check
          %p623 = pneg %p449
        $region66: #{tpu_custom_call.1} parent=11 // pred_check_branch
          %625 = sbr.rel (%p623) target = $region68
        $region67: #{tpu_custom_call.1} parent=11 // pred_region
          _
        $region68: #{tpu_custom_call.1} parent=11 // pred_fallthru
          _
        // Predicated region
        $region69: #{tpu_custom_call.1} parent=11 // pred_check
          %p626 = pneg %p470
        $region70: #{tpu_custom_call.1} parent=11 // pred_check_branch
          %628 = sbr.rel (%p626) target = $region72
        $region71: #{tpu_custom_call.1} parent=11 // pred_region
          _
        $region72: #{tpu_custom_call.1} parent=11 // pred_fallthru
          _
        // Predicated region
        $region73: #{tpu_custom_call.1} parent=11 // pred_check
          %p629 = pneg %p491
        $region74: #{tpu_custom_call.1} parent=11 // pred_check_branch
          %631 = sbr.rel (%p629) target = $region76
        $region75: #{tpu_custom_call.1} parent=11 // pred_region
          _
        $region76: #{tpu_custom_call.1} parent=11 // pred_fallthru
          _
      $region12: #{tpu_custom_call.1} parent=5 // pred_fallthru
        _
      %p632 = scmp.lt.s32.totalorder %s35, 2
      // Predicated region
      $region77: #{tpu_custom_call.1} parent=5 // pred_check
        %p633 = pneg %p632
      $region78: #{tpu_custom_call.1} parent=5 // pred_check_branch
        %635 = sbr.rel (%p633) target = $region80
      $region79: #{tpu_custom_call.1} parent=5 // pred_region
        // Predicated region
        $region81: #{tpu_custom_call.1} parent=79 // pred_check
          %p636 = pneg %p67
        $region82: #{tpu_custom_call.1} parent=79 // pred_check_branch
          %638 = sbr.rel (%p636) target = $region84
        $region83: #{tpu_custom_call.1} parent=79 // pred_region
          %p639 = scmp.lt.s32.totalorder %s42, 1
          %s640 = scalar_select %p639, %s42, 1
          %s641 = smul.addr %s640, 8
          %s642 = scalar_lea.vmem %s0, %s641
        $region84: #{tpu_custom_call.1} parent=79 // pred_fallthru
          _
        // Predicated region
        $region85: #{tpu_custom_call.1} parent=79 // pred_check
          %p643 = pneg %p93
        $region86: #{tpu_custom_call.1} parent=79 // pred_check_branch
          %645 = sbr.rel (%p643) target = $region88
        $region87: #{tpu_custom_call.1} parent=79 // pred_region
          %p646 = scmp.lt.s32.totalorder %s42, 1
          %s647 = scalar_select %p646, %s42, 1
          %s648 = smul.addr %s647, 8
          %s649 = scalar_lea.vmem %s1, %s648
        $region88: #{tpu_custom_call.1} parent=79 // pred_fallthru
          _
        // Predicated region
        $region89: #{tpu_custom_call.1} parent=79 // pred_check
          %p650 = pneg %p121
        $region90: #{tpu_custom_call.1} parent=79 // pred_check_branch
          %652 = sbr.rel (%p650) target = $region92
        $region91: #{tpu_custom_call.1} parent=79 // pred_region
          %p653 = scmp.lt.s32.totalorder %s42, 1
          %s654 = scalar_select %p653, %s42, 1
          %p655 = scmp.lt.s32.totalorder %s43, 0
          %s656 = scalar_select %p655, %s43, 0
          %s657 = sadd.s32 %s656, %s654
          %s658 = smul.addr %s657, 8
          %s659 = scalar_lea.vmem %s2, %s658
        $region92: #{tpu_custom_call.1} parent=79 // pred_fallthru
          _
        // Predicated region
        $region93: #{tpu_custom_call.1} parent=79 // pred_check
          %p660 = pneg %p149
        $region94: #{tpu_custom_call.1} parent=79 // pred_check_branch
          %662 = sbr.rel (%p660) target = $region96
        $region95: #{tpu_custom_call.1} parent=79 // pred_region
          %s663 = sand.u32 %s139, 1
          %s664 = scalar_lea.sflag [#allocation6], %s663
          %s665 = sand.u32 %s139, 1
          %s666 = smul.addr %s665, 8
          %s667 = scalar_lea.vmem [#allocation5], %s666
          %s669 = ssub.s32 128, 128
          %670 = vsyncadd %s664, %s669
          %s671 = sadd.s32 %s43, %s42
          %s672 = smul.addr %s671, 128
          %s673 = scalar_lea.hbm %s3, %s672
          %s675 = sshll.u32 %s667, 4
          %s676 = int_to_ptr.vmem [resolvable:$true] %s675
          %678 = dma.hbm_to_vmem [thread:$0]  %s673, 128, %s676, %s664
        $region96: #{tpu_custom_call.1} parent=79 // pred_fallthru
          _
      $region80: #{tpu_custom_call.1} parent=5 // pred_fallthru
        _
      %p679 = scmp.le.s32.totalorder 1, %s35
      %p680 = scmp.lt.s32.totalorder %s35, 3
      %p681 = pnand %p679, %p680
      %p682 = pneg %p681
      // Predicated region
      $region97: #{tpu_custom_call.1} parent=5 // pred_check
        _
      $region98: #{tpu_custom_call.1} parent=5 // pred_check_branch
        %684 = sbr.rel (%p681) target = $region100
      $region99: #{tpu_custom_call.1} parent=5 // pred_region
        %s685 = ssub.s32 %s35, 1
        %s686 = sand.u32 %s142, 1
        %s687 = scalar_lea.sflag [#allocation6], %s686
        %s688 = sand.u32 %s142, 1
        %s689 = smul.addr %s688, 8
        %s690 = scalar_lea.vmem [#allocation5], %s689
        // Predicated region
        $region101: #{tpu_custom_call.1} parent=99 // pred_check
          %p691 = pneg %p155
        $region102: #{tpu_custom_call.1} parent=99 // pred_check_branch
          %693 = sbr.rel (%p691) target = $region104
        $region103: #{tpu_custom_call.1} parent=99 // pred_region
          %694 = dma.done %s687, 128
        $region104: #{tpu_custom_call.1} parent=99 // pred_fallthru
          _
        // Predicated region
        $region105: #{tpu_custom_call.1} parent=99 // pred_check
          %p695 = pneg %p176
        $region106: #{tpu_custom_call.1} parent=99 // pred_check_branch
          %697 = sbr.rel (%p695) target = $region108
        $region107: #{tpu_custom_call.1} parent=99 // pred_region
          %698 = dma.done [#allocation9], 256
        $region108: #{tpu_custom_call.1} parent=99 // pred_fallthru
          _
        // Predicated region
        $region109: #{tpu_custom_call.1} parent=99 // pred_check
          %p699 = pneg %p197
        $region110: #{tpu_custom_call.1} parent=99 // pred_check_branch
          %701 = sbr.rel (%p699) target = $region112
        $region111: #{tpu_custom_call.1} parent=99 // pred_region
          %702 = dma.done [#allocation9], 256
        $region112: #{tpu_custom_call.1} parent=99 // pred_fallthru
          _
        // Predicated region
        $region113: #{tpu_custom_call.1} parent=99 // pred_check
          %p703 = pneg %p218
        $region114: #{tpu_custom_call.1} parent=99 // pred_check_branch
          %705 = sbr.rel (%p703) target = $region116
        $region115: #{tpu_custom_call.1} parent=99 // pred_region
          %706 = dma.done [#allocation12], 256
        $region116: #{tpu_custom_call.1} parent=99 // pred_fallthru
          _
        // Predicated region
        $region117: #{tpu_custom_call.1} parent=99 // pred_check
          %p707 = pneg %p302
        $region118: #{tpu_custom_call.1} parent=99 // pred_check_branch
          %709 = sbr.rel (%p707) target = $region120
        $region119: #{tpu_custom_call.1} parent=99 // pred_region
          %710 = dma.done [#allocation12], 256
        $region120: #{tpu_custom_call.1} parent=99 // pred_fallthru
          _
        // Predicated region
        $region121: #{tpu_custom_call.1} parent=99 // pred_check
          %p711 = pneg %p386
        $region122: #{tpu_custom_call.1} parent=99 // pred_check_branch
          %713 = sbr.rel (%p711) target = $region124
        $region123: #{tpu_custom_call.1} parent=99 // pred_region
          %714 = dma.done [#allocation15], 256
        $region124: #{tpu_custom_call.1} parent=99 // pred_fallthru
          _
        %p715 = scmp.lt.s32.totalorder %s44, 1
        %s716 = scalar_select %p715, %s44, 1
        %s717 = smul.addr %s716, 8
        %s718 = scalar_lea.vmem %s0, %s717
        %p719 = pneg %p73
        %p720 = pneg %p70
        %p721 = scmp.lt.s32.totalorder %s44, 1
        %s722 = scalar_select %p721, %s44, 1
        %s723 = smul.addr %s722, 8
        %s724 = scalar_lea.vmem %s1, %s723
        %p725 = pneg %p99
        %p726 = pneg %p96
        %p727 = scmp.lt.s32.totalorder %s44, 1
        %s728 = scalar_select %p727, %s44, 1
        %p729 = scmp.lt.s32.totalorder %s45, 0
        %s730 = scalar_select %p729, %s45, 0
        %s731 = sadd.s32 %s730, %s728
        %s732 = smul.addr %s731, 8
        %s733 = scalar_lea.vmem %s2, %s732
        %p734 = pneg %p127
        %p735 = pneg %p124
        %s736 = sand.u32 %s142, 1
        %s737 = scalar_lea.sflag [#allocation6], %s736
        %s738 = sand.u32 %s142, 1
        %s739 = smul.addr %s738, 8
        %s740 = scalar_lea.vmem [#allocation5], %s739
        %p741 = pneg %p155
        %p742 = pneg %p152
        %p743 = pneg %p176
        %p744 = pneg %p173
        %p745 = pneg %p197
        %p746 = pneg %p194
        %p747 = pneg %p218
        %p748 = pneg %p215
        %p749 = pneg %p239
        %p750 = pneg %p236
        %p751 = pneg %p260
        %p752 = pneg %p257
        %p753 = pneg %p281
        %p754 = pneg %p278
        %p755 = pneg %p302
        %p756 = pneg %p299
        %p757 = pneg %p323
        %p758 = pneg %p320
        %p759 = pneg %p344
        %p760 = pneg %p341
        %p761 = pneg %p365
        %p762 = pneg %p362
        %p763 = pneg %p386
        %p764 = pneg %p383
        %p765 = pneg %p407
        %p766 = pneg %p404
        %p767 = pneg %p428
        %p768 = pneg %p425
        %p769 = pneg %p449
        %p770 = pneg %p446
        %p771 = pneg %p470
        %p772 = pneg %p467
        %p773 = pneg %p491
        %p774 = pneg %p488
        %p775 = pneg %p519
        %p776 = pneg %p516
        %s777 = sand.u32 %s506, 1
        %s778 = scalar_lea.sflag [#allocation7], %s777
        %s779 = sand.u32 %s506, 1
        %s780 = smul.addr %s779, 8
        %s781 = scalar_lea.vmem [#allocation16], %s780
        %p782 = scmp.lt.s32.totalorder %s44, 1
        %s783 = scalar_select %p782, %s44, 1
        %s784 = smul.addr %s783, 8
        %s785 = scalar_lea.vmem %s0, %s784
        %p786 = scmp.lt.s32.totalorder %s44, 1
        %s787 = scalar_select %p786, %s44, 1
        %s788 = smul.addr %s787, 8
        %s789 = scalar_lea.vmem %s1, %s788
        %p790 = scmp.lt.s32.totalorder %s44, 1
        %s791 = scalar_select %p790, %s44, 1
        %p792 = scmp.lt.s32.totalorder %s45, 0
        %s793 = scalar_select %p792, %s45, 0
        %s794 = sadd.s32 %s793, %s791
        %s795 = smul.addr %s794, 8
        %s796 = scalar_lea.vmem %s2, %s795
        %p798 = scmp.eq.s32.totalorder %s45, 0
        // Predicated region
        $region125: #{tpu_custom_call.1} parent=99 // pred_check
          %p799 = pneg %p798
        $region126: #{tpu_custom_call.1} parent=99 // pred_check_branch
          %801 = sbr.rel (%p799) target = $region128
        $region127: #{tpu_custom_call.1} parent=99 // pred_region
          %v802 = vld [vmem:[%s785] sm:$0xff]
          %v803 = vld [vmem:[%s789] sm:$0xff]
          %v804 = vadd.f32 %v802, %v803
          %v805 = vpack.c.bf16 %v804, %v804
          %v806 = vld [vmem:[#allocation10] sm:$0xf]
          %v807 = vld [vmem:[#allocation10 + $0x4] sm:$0xf]
          %v808 = vld [vmem:[#allocation10 + $0x8] sm:$0xf]
          %v809 = vld [vmem:[#allocation10 + $0xc] sm:$0xf]
          %v810 = vld [vmem:[%s8] sm:$0x1]
          %v812 = vlaneseq
          %v813 = vshrl.u32 %v812, 7
          %v814 = vsub.s32 0, %v813
          %v815 = vrot.slane %v810, %v814
          %v821 = vunpack.c.l.b16 %v806
          %v822 = vunpack.c.l.b16 %v807
          %v823 = vunpack.c.l.b16 %v808
          %v824 = vunpack.c.l.b16 %v809
          %v825 = vpack.c.b16 %v822, %v821
          %v826 = vpack.c.b16 %v824, %v823
          %vm829 = vcmask 261120
          %v831 = vsel %vm829, %v805, 0
          %833 = vmatprep.subr.bf16.mxu0 0
          %834 = vmatpush1.bf16.msra.mxu0 0
          %835 = vmatprep.subr.bf16.mxu0 0
          %836 = vmatpush1.bf16.msra.mxu0 0
          %837 = vmatprep.subr.bf16.mxu0 0
          %838 = vmatpush1.bf16.msra.mxu0 0
          %839 = vmatprep.subr.bf16.mxu0 0
          %840 = vmatpush1.bf16.msra.mxu0 0
          %841 = vmatprep.subr.bf16.mxu0 0
          %842 = vmatpush1.bf16.msra.mxu0 0
          %843 = vmatprep.subr.bf16.mxu0 0
          %844 = vmatpush1.bf16.msra.mxu0 0
          %845 = vmatprep.subr.bf16.mxu0 0
          %846 = vmatpush1.bf16.msra.mxu0 %v826
          %847 = vmatprep.subr.bf16.mxu0 0
          %848 = vmatpush1.bf16.msra.mxu0 %v825
          %849 = vmatprep.subr.bf16.mxu0 0
          %850 = vmatpush2.bf16.msra.mxu0 0
          %851 = vmatprep.subr.bf16.mxu0 0
          %852 = vmatpush2.bf16.msra.mxu0 0
          %853 = vmatprep.subr.bf16.mxu0 0
          %854 = vmatpush2.bf16.msra.mxu0 0
          %855 = vmatprep.subr.bf16.mxu0 0
          %856 = vmatpush2.bf16.msra.mxu0 0
          %857 = vmatprep.subr.bf16.mxu0 0
          %858 = vmatpush2.bf16.msra.mxu0 0
          %859 = vmatprep.subr.bf16.mxu0 0
          %860 = vmatpush2.bf16.msra.mxu0 0
          %861 = vmatprep.subr.bf16.mxu0 0
          %862 = vmatpush2.bf16.msra.mxu0 0
          %863 = vmatprep.subr.bf16.mxu0 0
          %864 = vmatpush2.bf16.msra.mxu0 0
          %865 = vmatprep.mubr.bf16.mxu0 0
          %866 = vmatmul.mubr.bf16.gmra.mxu0 %v831
          %v867 = vpop.f32.mrf.mxu0
          %v868 = vadd.f32 %v815, %v867
          %v869 = vpop.f32.mrf.mxu0
          %v870 = vpop.f32.mrf.mxu0
          %v871 = vpop.f32.mrf.mxu0
          %872 = vdwg.mxu0
          %v873 = vpack.c.bf16 %v802, %v802
          %v874 = vld [vmem:[#allocation11] sm:$0xf]
          %v875 = vld [vmem:[#allocation11 + $0x4] sm:$0xf]
          %v876 = vld [vmem:[#allocation11 + $0x8] sm:$0xf]
          %v877 = vld [vmem:[#allocation11 + $0xc] sm:$0xf]
          %v878 = vld [vmem:[%s9] sm:$0x1]
          %v880 = vlaneseq
          %v881 = vshrl.u32 %v880, 7
          %v882 = vsub.s32 0, %v881
          %v883 = vrot.slane %v878, %v882
          %v889 = vunpack.c.l.b16 %v874
          %v890 = vunpack.c.l.b16 %v875
          %v891 = vunpack.c.l.b16 %v876
          %v892 = vunpack.c.l.b16 %v877
          %v893 = vpack.c.b16 %v890, %v889
          %v894 = vpack.c.b16 %v892, %v891
          %v898 = vsel %vm829, %v873, 0
          %900 = vmatprep.subr.bf16.mxu0 0
          %901 = vmatpush1.bf16.msra.mxu0 0
          %902 = vmatprep.subr.bf16.mxu0 0
          %903 = vmatpush1.bf16.msra.mxu0 0
          %904 = vmatprep.subr.bf16.mxu0 0
          %905 = vmatpush1.bf16.msra.mxu0 0
          %906 = vmatprep.subr.bf16.mxu0 0
          %907 = vmatpush1.bf16.msra.mxu0 0
          %908 = vmatprep.subr.bf16.mxu0 0
          %909 = vmatpush1.bf16.msra.mxu0 0
          %910 = vmatprep.subr.bf16.mxu0 0
          %911 = vmatpush1.bf16.msra.mxu0 0
          %912 = vmatprep.subr.bf16.mxu0 0
          %913 = vmatpush1.bf16.msra.mxu0 %v894
          %914 = vmatprep.subr.bf16.mxu0 0
          %915 = vmatpush1.bf16.msra.mxu0 %v893
          %916 = vmatprep.subr.bf16.mxu0 0
          %917 = vmatpush2.bf16.msra.mxu0 0
          %918 = vmatprep.subr.bf16.mxu0 0
          %919 = vmatpush2.bf16.msra.mxu0 0
          %920 = vmatprep.subr.bf16.mxu0 0
          %921 = vmatpush2.bf16.msra.mxu0 0
          %922 = vmatprep.subr.bf16.mxu0 0
          %923 = vmatpush2.bf16.msra.mxu0 0
          %924 = vmatprep.subr.bf16.mxu0 0
          %925 = vmatpush2.bf16.msra.mxu0 0
          %926 = vmatprep.subr.bf16.mxu0 0
          %927 = vmatpush2.bf16.msra.mxu0 0
          %928 = vmatprep.subr.bf16.mxu0 0
          %929 = vmatpush2.bf16.msra.mxu0 0
          %930 = vmatprep.subr.bf16.mxu0 0
          %931 = vmatpush2.bf16.msra.mxu0 0
          %932 = vmatprep.mubr.bf16.mxu0 0
          %933 = vmatmul.mubr.bf16.gmra.mxu0 %v898
          %v934 = vpop.f32.mrf.mxu0
          %v935 = vadd.f32 %v883, %v934
          %v936 = vpop.f32.mrf.mxu0
          %v937 = vpop.f32.mrf.mxu0
          %v938 = vpop.f32.mrf.mxu0
          %939 = vdwg.mxu0
          %v940 = vpack.c.bf16 %v868, %v868
          %vm941 = vcmask 257024
          %942 = vst.msk [vmem:[#allocation2] sm:$0xf] %vm941, %v940
          %v943 = vpack.c.bf16 %v935, %v935
          %944 = vst.msk [vmem:[#allocation3] sm:$0xf] %vm941, %v943
        $region128: #{tpu_custom_call.1} parent=99 // pred_fallthru
          _
        %v945 = vld [vmem:[%s796] sm:$0xff]
        %v946 = vld [vmem:[%s690] sm:$0xff]
        %v947 = vadd.f32 %v945, %v946
        %v948 = vpack.c.bf16 %v947, %v947
        %v949 = vld [vmem:[#allocation8] sm:$0xf]
        %v950 = vld [vmem:[#allocation8 + $0x4] sm:$0xf]
        %v951 = vld [vmem:[#allocation8 + $0x8] sm:$0xf]
        %v952 = vld [vmem:[#allocation8 + $0xc] sm:$0xf]
        %v953 = vld [vmem:[%s7] sm:$0x1]
        %v955 = vlaneseq
        %v956 = vshrl.u32 %v955, 7
        %v957 = vsub.s32 0, %v956
        %v958 = vrot.slane %v953, %v957
        %v964 = vunpack.c.l.b16 %v949
        %v965 = vunpack.c.l.b16 %v950
        %v966 = vunpack.c.l.b16 %v951
        %v967 = vunpack.c.l.b16 %v952
        %v968 = vpack.c.b16 %v965, %v964
        %v969 = vpack.c.b16 %v967, %v966
        %vm972 = vcmask 261120
        %v974 = vsel %vm972, %v948, 0
        %976 = vmatprep.subr.bf16.mxu0 0
        %977 = vmatpush1.bf16.msra.mxu0 0
        %978 = vmatprep.subr.bf16.mxu0 0
        %979 = vmatpush1.bf16.msra.mxu0 0
        %980 = vmatprep.subr.bf16.mxu0 0
        %981 = vmatpush1.bf16.msra.mxu0 0
        %982 = vmatprep.subr.bf16.mxu0 0
        %983 = vmatpush1.bf16.msra.mxu0 0
        %984 = vmatprep.subr.bf16.mxu0 0
        %985 = vmatpush1.bf16.msra.mxu0 0
        %986 = vmatprep.subr.bf16.mxu0 0
        %987 = vmatpush1.bf16.msra.mxu0 0
        %988 = vmatprep.subr.bf16.mxu0 0
        %989 = vmatpush1.bf16.msra.mxu0 %v969
        %990 = vmatprep.subr.bf16.mxu0 0
        %991 = vmatpush1.bf16.msra.mxu0 %v968
        %992 = vmatprep.subr.bf16.mxu0 0
        %993 = vmatpush2.bf16.msra.mxu0 0
        %994 = vmatprep.subr.bf16.mxu0 0
        %995 = vmatpush2.bf16.msra.mxu0 0
        %996 = vmatprep.subr.bf16.mxu0 0
        %997 = vmatpush2.bf16.msra.mxu0 0
        %998 = vmatprep.subr.bf16.mxu0 0
        %999 = vmatpush2.bf16.msra.mxu0 0
        %1000 = vmatprep.subr.bf16.mxu0 0
        %1001 = vmatpush2.bf16.msra.mxu0 0
        %1002 = vmatprep.subr.bf16.mxu0 0
        %1003 = vmatpush2.bf16.msra.mxu0 0
        %1004 = vmatprep.subr.bf16.mxu0 0
        %1005 = vmatpush2.bf16.msra.mxu0 0
        %1006 = vmatprep.subr.bf16.mxu0 0
        %1007 = vmatpush2.bf16.msra.mxu0 0
        %1008 = vmatprep.mubr.bf16.mxu0 0
        %1009 = vmatmul.mubr.bf16.gmra.mxu0 %v974
        %v1010 = vpop.f32.mrf.mxu0
        %v1011 = vadd.f32 %v958, %v1010
        %v1012 = vpop.f32.mrf.mxu0
        %v1013 = vpop.f32.mrf.mxu0
        %v1014 = vpop.f32.mrf.mxu0
        %1015 = vdwg.mxu0
        %v1016 = vpack.c.bf16 %v1011, %v1011
        %v1017 = vld [vmem:[#allocation2] sm:$0xf]
        %v1018 = vld [vmem:[#allocation3] sm:$0xf]
        %vm1019 = vcmask 64512
        %v1021 = vsel %vm1019, %v1016, 0
        %v1024 = vsel %vm1019, %v1017, 0
        %1026 = vmatprep.subr.bf16.mxu0 0
        %1027 = vmatpush1.bf16.xpose.msra.mxu0 0
        %1028 = vmatprep.subr.bf16.mxu0 0
        %1029 = vmatpush1.bf16.xpose.msra.mxu0 0
        %1030 = vmatprep.subr.bf16.mxu0 0
        %1031 = vmatpush1.bf16.xpose.msra.mxu0 0
        %1032 = vmatprep.subr.bf16.mxu0 0
        %1033 = vmatpush1.bf16.xpose.msra.mxu0 0
        %1034 = vmatprep.subr.bf16.mxu0 0
        %1035 = vmatpush1.bf16.xpose.msra.mxu0 0
        %1036 = vmatprep.subr.bf16.mxu0 0
        %1037 = vmatpush1.bf16.xpose.msra.mxu0 0
        %1038 = vmatprep.subr.bf16.mxu0 0
        %1039 = vmatpush1.bf16.xpose.msra.mxu0 0
        %1040 = vmatprep.subr.bf16.mxu0 0
        %1041 = vmatpush1.bf16.xpose.msra.mxu0 %v1024
        %1042 = vmatprep.subr.bf16.mxu0 0
        %1043 = vmatpush2.bf16.xpose.msra.mxu0 0
        %1044 = vmatprep.subr.bf16.mxu0 0
        %1045 = vmatpush2.bf16.xpose.msra.mxu0 0
        %1046 = vmatprep.subr.bf16.mxu0 0
        %1047 = vmatpush2.bf16.xpose.msra.mxu0 0
        %1048 = vmatprep.subr.bf16.mxu0 0
        %1049 = vmatpush2.bf16.xpose.msra.mxu0 0
        %1050 = vmatprep.subr.bf16.mxu0 0
        %1051 = vmatpush2.bf16.xpose.msra.mxu0 0
        %1052 = vmatprep.subr.bf16.mxu0 0
        %1053 = vmatpush2.bf16.xpose.msra.mxu0 0
        %1054 = vmatprep.subr.bf16.mxu0 0
        %1055 = vmatpush2.bf16.xpose.msra.mxu0 0
        %1056 = vmatprep.subr.bf16.mxu0 0
        %1057 = vmatpush2.bf16.xpose.msra.mxu0 0
        %1058 = vmatprep.mubr.bf16.mxu0 0
        %1059 = vmatmul.mubr.bf16.gmra.mxu0 %v1021
        %v1060 = vpop.f32.mrf.mxu0
        %v1061 = vadd.f32 0.0, %v1060
        %v1062 = vpop.f32.mrf.mxu0
        %v1063 = vpop.f32.mrf.mxu0
        %v1064 = vpop.f32.mrf.mxu0
        %1065 = vdwg.mxu0
        %v1066 = vsel %vm1019, %v1061, -inf
        %1067 = vmax.xlane.f32.xlu0 %v1066
        %v1068 = vpop.xlane.xlu0 %1067
        %v1069 = vsub.f32 %v1061, %v1068
        %v1070 = vmul.f32 %v1069, 1.442695
        %v1071 = vpow.pop %v1070
        %v1072 = vsel %vm1019, %v1071, 0.0
        %1073 = vadd.xlane.f32.xlu0 %v1072
        %v1074 = vpop.xlane.xlu0 %1073
        %v1075 = vrcp.pop %v1074
        %v1076 = vmul.f32 %v1071, %v1075
        %v1077 = vpack.c.bf16 %v1076, %v1076
        %v1079 = vsel %vm1019, %v1077, 0
        %vm1081 = vcmask 1043456
        %v1083 = vsel %vm1081, %v1018, 0
        %1085 = vmatprep.subr.bf16.mxu0 0
        %1086 = vmatpush1.bf16.msra.mxu0 0
        %1087 = vmatprep.subr.bf16.mxu0 0
        %1088 = vmatpush1.bf16.msra.mxu0 0
        %1089 = vmatprep.subr.bf16.mxu0 0
        %1090 = vmatpush1.bf16.msra.mxu0 0
        %1091 = vmatprep.subr.bf16.mxu0 0
        %1092 = vmatpush1.bf16.msra.mxu0 0
        %1093 = vmatprep.subr.bf16.mxu0 0
        %1094 = vmatpush1.bf16.msra.mxu0 0
        %1095 = vmatprep.subr.bf16.mxu0 0
        %1096 = vmatpush1.bf16.msra.mxu0 0
        %1097 = vmatprep.subr.bf16.mxu0 0
        %1098 = vmatpush1.bf16.msra.mxu0 0
        %1099 = vmatprep.subr.bf16.mxu0 0
        %1100 = vmatpush1.bf16.msra.mxu0 %v1083
        %1101 = vmatprep.subr.bf16.mxu0 0
        %1102 = vmatpush2.bf16.msra.mxu0 0
        %1103 = vmatprep.subr.bf16.mxu0 0
        %1104 = vmatpush2.bf16.msra.mxu0 0
        %1105 = vmatprep.subr.bf16.mxu0 0
        %1106 = vmatpush2.bf16.msra.mxu0 0
        %1107 = vmatprep.subr.bf16.mxu0 0
        %1108 = vmatpush2.bf16.msra.mxu0 0
        %1109 = vmatprep.subr.bf16.mxu0 0
        %1110 = vmatpush2.bf16.msra.mxu0 0
        %1111 = vmatprep.subr.bf16.mxu0 0
        %1112 = vmatpush2.bf16.msra.mxu0 0
        %1113 = vmatprep.subr.bf16.mxu0 0
        %1114 = vmatpush2.bf16.msra.mxu0 0
        %1115 = vmatprep.subr.bf16.mxu0 0
        %1116 = vmatpush2.bf16.msra.mxu0 0
        %1117 = vmatprep.mubr.bf16.mxu0 0
        %1118 = vmatmul.mubr.bf16.gmra.mxu0 %v1079
        %v1119 = vpop.f32.mrf.mxu0
        %v1120 = vadd.f32 0.0, %v1119
        %v1121 = vpop.f32.mrf.mxu0
        %v1122 = vpop.f32.mrf.mxu0
        %v1123 = vpop.f32.mrf.mxu0
        %1124 = vdwg.mxu0
        %1125 = vst.msk [vmem:[#allocation4] sm:$0xff] %vm1019, %v1120
        %1127 = vrot.lane.b32.xlu0 %v1016, 120
        %v1128 = vpop.permute.xlu0 %1127
        %v1130 = vunpack.c.l.b16 %v1017
        %v1131 = vpack.c.b16 %v1130, %v1130
        %1132 = vrot.lane.b32.xlu0 %v1131, 120
        %v1133 = vpop.permute.xlu0 %1132
        %v1135 = vsel %vm1019, %v1128, 0
        %v1138 = vsel %vm1019, %v1133, 0
        %1140 = vmatprep.subr.bf16.mxu0 0
        %1141 = vmatpush1.bf16.xpose.msra.mxu0 0
        %1142 = vmatprep.subr.bf16.mxu0 0
        %1143 = vmatpush1.bf16.xpose.msra.mxu0 0
        %1144 = vmatprep.subr.bf16.mxu0 0
        %1145 = vmatpush1.bf16.xpose.msra.mxu0 0
        %1146 = vmatprep.subr.bf16.mxu0 0
        %1147 = vmatpush1.bf16.xpose.msra.mxu0 0
        %1148 = vmatprep.subr.bf16.mxu0 0
        %1149 = vmatpush1.bf16.xpose.msra.mxu0 0
        %1150 = vmatprep.subr.bf16.mxu0 0
        %1151 = vmatpush1.bf16.xpose.msra.mxu0 0
        %1152 = vmatprep.subr.bf16.mxu0 0
        %1153 = vmatpush1.bf16.xpose.msra.mxu0 0
        %1154 = vmatprep.subr.bf16.mxu0 0
        %1155 = vmatpush1.bf16.xpose.msra.mxu0 %v1138
        %1156 = vmatprep.subr.bf16.mxu0 0
        %1157 = vmatpush2.bf16.xpose.msra.mxu0 0
        %1158 = vmatprep.subr.bf16.mxu0 0
        %1159 = vmatpush2.bf16.xpose.msra.mxu0 0
        %1160 = vmatprep.subr.bf16.mxu0 0
        %1161 = vmatpush2.bf16.xpose.msra.mxu0 0
        %1162 = vmatprep.subr.bf16.mxu0 0
        %1163 = vmatpush2.bf16.xpose.msra.mxu0 0
        %1164 = vmatprep.subr.bf16.mxu0 0
        %1165 = vmatpush2.bf16.xpose.msra.mxu0 0
        %1166 = vmatprep.subr.bf16.mxu0 0
        %1167 = vmatpush2.bf16.xpose.msra.mxu0 0
        %1168 = vmatprep.subr.bf16.mxu0 0
        %1169 = vmatpush2.bf16.xpose.msra.mxu0 0
        %1170 = vmatprep.subr.bf16.mxu0 0
        %1171 = vmatpush2.bf16.xpose.msra.mxu0 0
        %1172 = vmatprep.mubr.bf16.mxu0 0
        %1173 = vmatmul.mubr.bf16.gmra.mxu0 %v1135
        %v1174 = vpop.f32.mrf.mxu0
        %v1175 = vadd.f32 0.0, %v1174
        %v1176 = vpop.f32.mrf.mxu0
        %v1177 = vpop.f32.mrf.mxu0
        %v1178 = vpop.f32.mrf.mxu0
        %1179 = vdwg.mxu0
        %v1180 = vsel %vm1019, %v1175, -inf
        %1181 = vmax.xlane.f32.xlu0 %v1180
        %v1182 = vpop.xlane.xlu0 %1181
        %v1183 = vsub.f32 %v1175, %v1182
        %v1184 = vmul.f32 %v1183, 1.442695
        %v1185 = vpow.pop %v1184
        %v1186 = vsel %vm1019, %v1185, 0.0
        %1187 = vadd.xlane.f32.xlu0 %v1186
        %v1188 = vpop.xlane.xlu0 %1187
        %v1189 = vrcp.pop %v1188
        %v1190 = vmul.f32 %v1185, %v1189
        %v1191 = vpack.c.bf16 %v1190, %v1190
        %v1193 = vunpack.c.l.b16 %v1018
        %v1194 = vpack.c.b16 %v1193, %v1193
        %1195 = vrot.lane.b32.xlu0 %v1194, 120
        %v1196 = vpop.permute.xlu0 %1195
        %v1198 = vsel %vm1019, %v1191, 0
        %v1201 = vsel %vm1081, %v1196, 0
        %1203 = vmatprep.subr.bf16.mxu0 0
        %1204 = vmatpush1.bf16.msra.mxu0 0
        %1205 = vmatprep.subr.bf16.mxu0 0
        %1206 = vmatpush1.bf16.msra.mxu0 0
        %1207 = vmatprep.subr.bf16.mxu0 0
        %1208 = vmatpush1.bf16.msra.mxu0 0
        %1209 = vmatprep.subr.bf16.mxu0 0
        %1210 = vmatpush1.bf16.msra.mxu0 0
        %1211 = vmatprep.subr.bf16.mxu0 0
        %1212 = vmatpush1.bf16.msra.mxu0 0
        %1213 = vmatprep.subr.bf16.mxu0 0
        %1214 = vmatpush1.bf16.msra.mxu0 0
        %1215 = vmatprep.subr.bf16.mxu0 0
        %1216 = vmatpush1.bf16.msra.mxu0 0
        %1217 = vmatprep.subr.bf16.mxu0 0
        %1218 = vmatpush1.bf16.msra.mxu0 %v1201
        %1219 = vmatprep.subr.bf16.mxu0 0
        %1220 = vmatpush2.bf16.msra.mxu0 0
        %1221 = vmatprep.subr.bf16.mxu0 0
        %1222 = vmatpush2.bf16.msra.mxu0 0
        %1223 = vmatprep.subr.bf16.mxu0 0
        %1224 = vmatpush2.bf16.msra.mxu0 0
        %1225 = vmatprep.subr.bf16.mxu0 0
        %1226 = vmatpush2.bf16.msra.mxu0 0
        %1227 = vmatprep.subr.bf16.mxu0 0
        %1228 = vmatpush2.bf16.msra.mxu0 0
        %1229 = vmatprep.subr.bf16.mxu0 0
        %1230 = vmatpush2.bf16.msra.mxu0 0
        %1231 = vmatprep.subr.bf16.mxu0 0
        %1232 = vmatpush2.bf16.msra.mxu0 0
        %1233 = vmatprep.subr.bf16.mxu0 0
        %1234 = vmatpush2.bf16.msra.mxu0 0
        %1235 = vmatprep.mubr.bf16.mxu0 0
        %1236 = vmatmul.mubr.bf16.gmra.mxu0 %v1198
        %v1237 = vpop.f32.mrf.mxu0
        %v1238 = vadd.f32 0.0, %v1237
        %v1239 = vpop.f32.mrf.mxu0
        %v1240 = vpop.f32.mrf.mxu0
        %v1241 = vpop.f32.mrf.mxu0
        %1242 = vdwg.mxu0
        %1244 = vrot.lane.b32.xlu0 %v1238, 8
        %v1245 = vpop.permute.xlu0 %1244
        %vm1247 = vcmask 130112
        %1248 = vst.msk [vmem:[#allocation4] sm:$0xff] %vm1247, %v1245
        %1249 = vrot.lane.b32.xlu0 %v1016, 112
        %v1250 = vpop.permute.xlu0 %1249
        %1251 = vrot.lane.b32.xlu0 %v1131, 112
        %v1252 = vpop.permute.xlu0 %1251
        %v1254 = vsel %vm1019, %v1250, 0
        %v1257 = vsel %vm1019, %v1252, 0
        %1259 = vmatprep.subr.bf16.mxu0 0
        %1260 = vmatpush1.bf16.xpose.msra.mxu0 0
        %1261 = vmatprep.subr.bf16.mxu0 0
        %1262 = vmatpush1.bf16.xpose.msra.mxu0 0
        %1263 = vmatprep.subr.bf16.mxu0 0
        %1264 = vmatpush1.bf16.xpose.msra.mxu0 0
        %1265 = vmatprep.subr.bf16.mxu0 0
        %1266 = vmatpush1.bf16.xpose.msra.mxu0 0
        %1267 = vmatprep.subr.bf16.mxu0 0
        %1268 = vmatpush1.bf16.xpose.msra.mxu0 0
        %1269 = vmatprep.subr.bf16.mxu0 0
        %1270 = vmatpush1.bf16.xpose.msra.mxu0 0
        %1271 = vmatprep.subr.bf16.mxu0 0
        %1272 = vmatpush1.bf16.xpose.msra.mxu0 0
        %1273 = vmatprep.subr.bf16.mxu0 0
        %1274 = vmatpush1.bf16.xpose.msra.mxu0 %v1257
        %1275 = vmatprep.subr.bf16.mxu0 0
        %1276 = vmatpush2.bf16.xpose.msra.mxu0 0
        %1277 = vmatprep.subr.bf16.mxu0 0
        %1278 = vmatpush2.bf16.xpose.msra.mxu0 0
        %1279 = vmatprep.subr.bf16.mxu0 0
        %1280 = vmatpush2.bf16.xpose.msra.mxu0 0
        %1281 = vmatprep.subr.bf16.mxu0 0
        %1282 = vmatpush2.bf16.xpose.msra.mxu0 0
        %1283 = vmatprep.subr.bf16.mxu0 0
        %1284 = vmatpush2.bf16.xpose.msra.mxu0 0
        %1285 = vmatprep.subr.bf16.mxu0 0
        %1286 = vmatpush2.bf16.xpose.msra.mxu0 0
        %1287 = vmatprep.subr.bf16.mxu0 0
        %1288 = vmatpush2.bf16.xpose.msra.mxu0 0
        %1289 = vmatprep.subr.bf16.mxu0 0
        %1290 = vmatpush2.bf16.xpose.msra.mxu0 0
        %1291 = vmatprep.mubr.bf16.mxu0 0
        %1292 = vmatmul.mubr.bf16.gmra.mxu0 %v1254
        %v1293 = vpop.f32.mrf.mxu0
        %v1294 = vadd.f32 0.0, %v1293
        %v1295 = vpop.f32.mrf.mxu0
        %v1296 = vpop.f32.mrf.mxu0
        %v1297 = vpop.f32.mrf.mxu0
        %1298 = vdwg.mxu0
        %v1299 = vsel %vm1019, %v1294, -inf
        %1300 = vmax.xlane.f32.xlu0 %v1299
        %v1301 = vpop.xlane.xlu0 %1300
        %v1302 = vsub.f32 %v1294, %v1301
        %v1303 = vmul.f32 %v1302, 1.442695
        %v1304 = vpow.pop %v1303
        %v1305 = vsel %vm1019, %v1304, 0.0
        %1306 = vadd.xlane.f32.xlu0 %v1305
        %v1307 = vpop.xlane.xlu0 %1306
        %v1308 = vrcp.pop %v1307
        %v1309 = vmul.f32 %v1304, %v1308
        %v1310 = vpack.c.bf16 %v1309, %v1309
        %1311 = vrot.lane.b32.xlu0 %v1194, 112
        %v1312 = vpop.permute.xlu0 %1311
        %v1314 = vsel %vm1019, %v1310, 0
        %v1317 = vsel %vm1081, %v1312, 0
        %1319 = vmatprep.subr.bf16.mxu0 0
        %1320 = vmatpush1.bf16.msra.mxu0 0
        %1321 = vmatprep.subr.bf16.mxu0 0
        %1322 = vmatpush1.bf16.msra.mxu0 0
        %1323 = vmatprep.subr.bf16.mxu0 0
        %1324 = vmatpush1.bf16.msra.mxu0 0
        %1325 = vmatprep.subr.bf16.mxu0 0
        %1326 = vmatpush1.bf16.msra.mxu0 0
        %1327 = vmatprep.subr.bf16.mxu0 0
        %1328 = vmatpush1.bf16.msra.mxu0 0
        %1329 = vmatprep.subr.bf16.mxu0 0
        %1330 = vmatpush1.bf16.msra.mxu0 0
        %1331 = vmatprep.subr.bf16.mxu0 0
        %1332 = vmatpush1.bf16.msra.mxu0 0
        %1333 = vmatprep.subr.bf16.mxu0 0
        %1334 = vmatpush1.bf16.msra.mxu0 %v1317
        %1335 = vmatprep.subr.bf16.mxu0 0
        %1336 = vmatpush2.bf16.msra.mxu0 0
        %1337 = vmatprep.subr.bf16.mxu0 0
        %1338 = vmatpush2.bf16.msra.mxu0 0
        %1339 = vmatprep.subr.bf16.mxu0 0
        %1340 = vmatpush2.bf16.msra.mxu0 0
        %1341 = vmatprep.subr.bf16.mxu0 0
        %1342 = vmatpush2.bf16.msra.mxu0 0
        %1343 = vmatprep.subr.bf16.mxu0 0
        %1344 = vmatpush2.bf16.msra.mxu0 0
        %1345 = vmatprep.subr.bf16.mxu0 0
        %1346 = vmatpush2.bf16.msra.mxu0 0
        %1347 = vmatprep.subr.bf16.mxu0 0
        %1348 = vmatpush2.bf16.msra.mxu0 0
        %1349 = vmatprep.subr.bf16.mxu0 0
        %1350 = vmatpush2.bf16.msra.mxu0 0
        %1351 = vmatprep.mubr.bf16.mxu0 0
        %1352 = vmatmul.mubr.bf16.gmra.mxu0 %v1314
        %v1353 = vpop.f32.mrf.mxu0
        %v1354 = vadd.f32 0.0, %v1353
        %v1355 = vpop.f32.mrf.mxu0
        %v1356 = vpop.f32.mrf.mxu0
        %v1357 = vpop.f32.mrf.mxu0
        %1358 = vdwg.mxu0
        %1360 = vrot.lane.b32.xlu0 %v1354, 16
        %v1361 = vpop.permute.xlu0 %1360
        %vm1363 = vcmask 195712
        %1364 = vst.msk [vmem:[#allocation4] sm:$0xff] %vm1363, %v1361
        %1365 = vrot.lane.b32.xlu0 %v1016, 104
        %v1366 = vpop.permute.xlu0 %1365
        %1367 = vrot.lane.b32.xlu0 %v1131, 104
        %v1368 = vpop.permute.xlu0 %1367
        %v1370 = vsel %vm1019, %v1366, 0
        %v1373 = vsel %vm1019, %v1368, 0
        %1375 = vmatprep.subr.bf16.mxu0 0
        %1376 = vmatpush1.bf16.xpose.msra.mxu0 0
        %1377 = vmatprep.subr.bf16.mxu0 0
        %1378 = vmatpush1.bf16.xpose.msra.mxu0 0
        %1379 = vmatprep.subr.bf16.mxu0 0
        %1380 = vmatpush1.bf16.xpose.msra.mxu0 0
        %1381 = vmatprep.subr.bf16.mxu0 0
        %1382 = vmatpush1.bf16.xpose.msra.mxu0 0
        %1383 = vmatprep.subr.bf16.mxu0 0
        %1384 = vmatpush1.bf16.xpose.msra.mxu0 0
        %1385 = vmatprep.subr.bf16.mxu0 0
        %1386 = vmatpush1.bf16.xpose.msra.mxu0 0
        %1387 = vmatprep.subr.bf16.mxu0 0
        %1388 = vmatpush1.bf16.xpose.msra.mxu0 0
        %1389 = vmatprep.subr.bf16.mxu0 0
        %1390 = vmatpush1.bf16.xpose.msra.mxu0 %v1373
        %1391 = vmatprep.subr.bf16.mxu0 0
        %1392 = vmatpush2.bf16.xpose.msra.mxu0 0
        %1393 = vmatprep.subr.bf16.mxu0 0
        %1394 = vmatpush2.bf16.xpose.msra.mxu0 0
        %1395 = vmatprep.subr.bf16.mxu0 0
        %1396 = vmatpush2.bf16.xpose.msra.mxu0 0
        %1397 = vmatprep.subr.bf16.mxu0 0
        %1398 = vmatpush2.bf16.xpose.msra.mxu0 0
        %1399 = vmatprep.subr.bf16.mxu0 0
        %1400 = vmatpush2.bf16.xpose.msra.mxu0 0
        %1401 = vmatprep.subr.bf16.mxu0 0
        %1402 = vmatpush2.bf16.xpose.msra.mxu0 0
        %1403 = vmatprep.subr.bf16.mxu0 0
        %1404 = vmatpush2.bf16.xpose.msra.mxu0 0
        %1405 = vmatprep.subr.bf16.mxu0 0
        %1406 = vmatpush2.bf16.xpose.msra.mxu0 0
        %1407 = vmatprep.mubr.bf16.mxu0 0
        %1408 = vmatmul.mubr.bf16.gmra.mxu0 %v1370
        %v1409 = vpop.f32.mrf.mxu0
        %v1410 = vadd.f32 0.0, %v1409
        %v1411 = vpop.f32.mrf.mxu0
        %v1412 = vpop.f32.mrf.mxu0
        %v1413 = vpop.f32.mrf.mxu0
        %1414 = vdwg.mxu0
        %v1415 = vsel %vm1019, %v1410, -inf
        %1416 = vmax.xlane.f32.xlu0 %v1415
        %v1417 = vpop.xlane.xlu0 %1416
        %v1418 = vsub.f32 %v1410, %v1417
        %v1419 = vmul.f32 %v1418, 1.442695
        %v1420 = vpow.pop %v1419
        %v1421 = vsel %vm1019, %v1420, 0.0
        %1422 = vadd.xlane.f32.xlu0 %v1421
        %v1423 = vpop.xlane.xlu0 %1422
        %v1424 = vrcp.pop %v1423
        %v1425 = vmul.f32 %v1420, %v1424
        %v1426 = vpack.c.bf16 %v1425, %v1425
        %1427 = vrot.lane.b32.xlu0 %v1194, 104
        %v1428 = vpop.permute.xlu0 %1427
        %v1430 = vsel %vm1019, %v1426, 0
        %v1433 = vsel %vm1081, %v1428, 0
        %1435 = vmatprep.subr.bf16.mxu0 0
        %1436 = vmatpush1.bf16.msra.mxu0 0
        %1437 = vmatprep.subr.bf16.mxu0 0
        %1438 = vmatpush1.bf16.msra.mxu0 0
        %1439 = vmatprep.subr.bf16.mxu0 0
        %1440 = vmatpush1.bf16.msra.mxu0 0
        %1441 = vmatprep.subr.bf16.mxu0 0
        %1442 = vmatpush1.bf16.msra.mxu0 0
        %1443 = vmatprep.subr.bf16.mxu0 0
        %1444 = vmatpush1.bf16.msra.mxu0 0
        %1445 = vmatprep.subr.bf16.mxu0 0
        %1446 = vmatpush1.bf16.msra.mxu0 0
        %1447 = vmatprep.subr.bf16.mxu0 0
        %1448 = vmatpush1.bf16.msra.mxu0 0
        %1449 = vmatprep.subr.bf16.mxu0 0
        %1450 = vmatpush1.bf16.msra.mxu0 %v1433
        %1451 = vmatprep.subr.bf16.mxu0 0
        %1452 = vmatpush2.bf16.msra.mxu0 0
        %1453 = vmatprep.subr.bf16.mxu0 0
        %1454 = vmatpush2.bf16.msra.mxu0 0
        %1455 = vmatprep.subr.bf16.mxu0 0
        %1456 = vmatpush2.bf16.msra.mxu0 0
        %1457 = vmatprep.subr.bf16.mxu0 0
        %1458 = vmatpush2.bf16.msra.mxu0 0
        %1459 = vmatprep.subr.bf16.mxu0 0
        %1460 = vmatpush2.bf16.msra.mxu0 0
        %1461 = vmatprep.subr.bf16.mxu0 0
        %1462 = vmatpush2.bf16.msra.mxu0 0
        %1463 = vmatprep.subr.bf16.mxu0 0
        %1464 = vmatpush2.bf16.msra.mxu0 0
        %1465 = vmatprep.subr.bf16.mxu0 0
        %1466 = vmatpush2.bf16.msra.mxu0 0
        %1467 = vmatprep.mubr.bf16.mxu0 0
        %1468 = vmatmul.mubr.bf16.gmra.mxu0 %v1430
        %v1469 = vpop.f32.mrf.mxu0
        %v1470 = vadd.f32 0.0, %v1469
        %v1471 = vpop.f32.mrf.mxu0
        %v1472 = vpop.f32.mrf.mxu0
        %v1473 = vpop.f32.mrf.mxu0
        %1474 = vdwg.mxu0
        %1476 = vrot.lane.b32.xlu0 %v1470, 24
        %v1477 = vpop.permute.xlu0 %1476
        %vm1479 = vcmask 261312
        %1480 = vst.msk [vmem:[#allocation4] sm:$0xff] %vm1479, %v1477
        %v1481 = vld [vmem:[#allocation4] sm:$0xff]
        %v1482 = vpack.c.bf16 %v1481, %v1481
        %v1483 = vld [vmem:[#allocation13] sm:$0xf]
        %v1484 = vld [vmem:[#allocation13 + $0x4] sm:$0xf]
        %v1485 = vld [vmem:[#allocation13 + $0x8] sm:$0xf]
        %v1486 = vld [vmem:[#allocation13 + $0xc] sm:$0xf]
        %v1487 = vld [vmem:[%s11] sm:$0x1]
        %v1489 = vlaneseq
        %v1490 = vshrl.u32 %v1489, 7
        %v1491 = vsub.s32 0, %v1490
        %v1492 = vrot.slane %v1487, %v1491
        %v1498 = vunpack.c.l.b16 %v1483
        %v1499 = vunpack.c.l.b16 %v1484
        %v1500 = vunpack.c.l.b16 %v1485
        %v1501 = vunpack.c.l.b16 %v1486
        %v1502 = vpack.c.b16 %v1499, %v1498
        %v1503 = vpack.c.b16 %v1501, %v1500
        %v1507 = vsel %vm972, %v1482, 0
        %1509 = vmatprep.subr.bf16.mxu0 0
        %1510 = vmatpush1.bf16.msra.mxu0 0
        %1511 = vmatprep.subr.bf16.mxu0 0
        %1512 = vmatpush1.bf16.msra.mxu0 0
        %1513 = vmatprep.subr.bf16.mxu0 0
        %1514 = vmatpush1.bf16.msra.mxu0 0
        %1515 = vmatprep.subr.bf16.mxu0 0
        %1516 = vmatpush1.bf16.msra.mxu0 0
        %1517 = vmatprep.subr.bf16.mxu0 0
        %1518 = vmatpush1.bf16.msra.mxu0 0
        %1519 = vmatprep.subr.bf16.mxu0 0
        %1520 = vmatpush1.bf16.msra.mxu0 0
        %1521 = vmatprep.subr.bf16.mxu0 0
        %1522 = vmatpush1.bf16.msra.mxu0 %v1503
        %1523 = vmatprep.subr.bf16.mxu0 0
        %1524 = vmatpush1.bf16.msra.mxu0 %v1502
        %1525 = vmatprep.subr.bf16.mxu0 0
        %1526 = vmatpush2.bf16.msra.mxu0 0
        %1527 = vmatprep.subr.bf16.mxu0 0
        %1528 = vmatpush2.bf16.msra.mxu0 0
        %1529 = vmatprep.subr.bf16.mxu0 0
        %1530 = vmatpush2.bf16.msra.mxu0 0
        %1531 = vmatprep.subr.bf16.mxu0 0
        %1532 = vmatpush2.bf16.msra.mxu0 0
        %1533 = vmatprep.subr.bf16.mxu0 0
        %1534 = vmatpush2.bf16.msra.mxu0 0
        %1535 = vmatprep.subr.bf16.mxu0 0
        %1536 = vmatpush2.bf16.msra.mxu0 0
        %1537 = vmatprep.subr.bf16.mxu0 0
        %1538 = vmatpush2.bf16.msra.mxu0 0
        %1539 = vmatprep.subr.bf16.mxu0 0
        %1540 = vmatpush2.bf16.msra.mxu0 0
        %1541 = vmatprep.mubr.bf16.mxu0 0
        %1542 = vmatmul.mubr.bf16.gmra.mxu0 %v1507
        %v1543 = vpop.f32.mrf.mxu0
        %v1544 = vadd.f32 %v1492, %v1543
        %v1545 = vpop.f32.mrf.mxu0
        %v1546 = vpop.f32.mrf.mxu0
        %v1547 = vpop.f32.mrf.mxu0
        %1548 = vdwg.mxu0
        %v1549 = vadd.f32 %v945, %v1544
        %v1550 = vld [vmem:[%s12] sm:$0x1]
        %v1551 = vld [vmem:[%s13] sm:$0x1]
        %v1552 = vsel %vm972, %v1549, 0.0
        %1553 = vadd.xlane.f32.xlu0 %v1552
        %v1554 = vpop.xlane.xlu0 %1553
        %v1555 = vrcp.pop 32.0
        %v1556 = vmul.f32 %v1554, %v1555
        %v1557 = vsub.f32 %v1549, %v1556
        %v1558 = vmul.f32 %v1557, %v1557
        %v1559 = vsel %vm972, %v1558, 0.0
        %1560 = vadd.xlane.f32.xlu0 %v1559
        %v1561 = vpop.xlane.xlu0 %1560
        %v1562 = vmul.f32 %v1561, %v1555
        %v1563 = vadd.f32 %v1562, 1e-05
        %v1564 = vrsqrt.pop %v1563
        %v1565 = vmul.f32 %v1557, %v1564
        %v1567 = vlaneseq
        %v1568 = vshrl.u32 %v1567, 7
        %v1569 = vsub.s32 0, %v1568
        %v1570 = vrot.slane %v1550, %v1569
        %v1572 = vmul.f32 %v1565, %v1570
        %v1574 = vlaneseq
        %v1575 = vshrl.u32 %v1574, 7
        %v1576 = vsub.s32 0, %v1575
        %v1577 = vrot.slane %v1551, %v1576
        %v1579 = vadd.f32 %v1572, %v1577
        %v1580 = vpack.c.bf16 %v1579, %v1579
        %v1581 = vld [vmem:[#allocation14] sm:$0xf]
        %v1582 = vld [vmem:[#allocation14 + $0x4] sm:$0xf]
        %v1583 = vld [vmem:[#allocation14 + $0x8] sm:$0xf]
        %v1584 = vld [vmem:[#allocation14 + $0xc] sm:$0xf]
        %v1585 = vld [vmem:[%s15] sm:$0x1]
        %v1587 = vlaneseq
        %v1588 = vshrl.u32 %v1587, 7
        %v1589 = vsub.s32 0, %v1588
        %v1590 = vrot.slane %v1585, %v1589
        %v1596 = vunpack.c.l.b16 %v1581
        %v1597 = vunpack.c.l.b16 %v1582
        %v1598 = vunpack.c.l.b16 %v1583
        %v1599 = vunpack.c.l.b16 %v1584
        %v1600 = vpack.c.b16 %v1597, %v1596
        %v1601 = vpack.c.b16 %v1599, %v1598
        %v1605 = vsel %vm972, %v1580, 0
        %1607 = vmatprep.subr.bf16.mxu0 0
        %1608 = vmatpush1.bf16.msra.mxu0 0
        %1609 = vmatprep.subr.bf16.mxu0 0
        %1610 = vmatpush1.bf16.msra.mxu0 0
        %1611 = vmatprep.subr.bf16.mxu0 0
        %1612 = vmatpush1.bf16.msra.mxu0 0
        %1613 = vmatprep.subr.bf16.mxu0 0
        %1614 = vmatpush1.bf16.msra.mxu0 0
        %1615 = vmatprep.subr.bf16.mxu0 0
        %1616 = vmatpush1.bf16.msra.mxu0 0
        %1617 = vmatprep.subr.bf16.mxu0 0
        %1618 = vmatpush1.bf16.msra.mxu0 0
        %1619 = vmatprep.subr.bf16.mxu0 0
        %1620 = vmatpush1.bf16.msra.mxu0 %v1601
        %1621 = vmatprep.subr.bf16.mxu0 0
        %1622 = vmatpush1.bf16.msra.mxu0 %v1600
        %1623 = vmatprep.subr.bf16.mxu0 0
        %1624 = vmatpush2.bf16.msra.mxu0 0
        %1625 = vmatprep.subr.bf16.mxu0 0
        %1626 = vmatpush2.bf16.msra.mxu0 0
        %1627 = vmatprep.subr.bf16.mxu0 0
        %1628 = vmatpush2.bf16.msra.mxu0 0
        %1629 = vmatprep.subr.bf16.mxu0 0
        %1630 = vmatpush2.bf16.msra.mxu0 0
        %1631 = vmatprep.subr.bf16.mxu0 0
        %1632 = vmatpush2.bf16.msra.mxu0 0
        %1633 = vmatprep.subr.bf16.mxu0 0
        %1634 = vmatpush2.bf16.msra.mxu0 0
        %1635 = vmatprep.subr.bf16.mxu0 0
        %1636 = vmatpush2.bf16.msra.mxu0 0
        %1637 = vmatprep.subr.bf16.mxu0 0
        %1638 = vmatpush2.bf16.msra.mxu0 0
        %1639 = vmatprep.mubr.bf16.mxu0 0
        %1640 = vmatmul.mubr.bf16.gmra.mxu0 %v1605
        %v1641 = vpop.f32.mrf.mxu0
        %v1642 = vadd.f32 %v1590, %v1641
        %v1643 = vpop.f32.mrf.mxu0
        %v1644 = vpop.f32.mrf.mxu0
        %v1645 = vpop.f32.mrf.mxu0
        %1646 = vdwg.mxu0
        %v1647 = vmax.f32 %v1642, 0.0
        %v1648 = vpack.c.bf16 %v1647, %v1647
        %v1649 = vld [vmem:[%s16] sm:$0xf]
        %v1650 = vld [vmem:[%s16 + $0x4] sm:$0xf]
        %v1651 = vld [vmem:[%s16 + $0x8] sm:$0xf]
        %v1652 = vld [vmem:[%s16 + $0xc] sm:$0xf]
        %v1653 = vld [vmem:[%s16 + $0x10] sm:$0xf]
        %v1654 = vld [vmem:[%s16 + $0x14] sm:$0xf]
        %v1655 = vld [vmem:[%s16 + $0x18] sm:$0xf]
        %v1656 = vld [vmem:[%s16 + $0x1c] sm:$0xf]
        %v1657 = vld [vmem:[%s17] sm:$0x1]
        %v1659 = vlaneseq
        %v1660 = vshrl.u32 %v1659, 7
        %v1661 = vsub.s32 0, %v1660
        %v1662 = vrot.slane %v1657, %v1661
        %v1672 = vunpack.c.l.b16 %v1649
        %v1673 = vunpack.c.l.b16 %v1650
        %v1674 = vunpack.c.l.b16 %v1651
        %v1675 = vunpack.c.l.b16 %v1652
        %v1676 = vunpack.c.l.b16 %v1653
        %v1677 = vunpack.c.l.b16 %v1654
        %v1678 = vunpack.c.l.b16 %v1655
        %v1679 = vunpack.c.l.b16 %v1656
        %v1680 = vpack.c.b16 %v1673, %v1672
        %v1681 = vpack.c.b16 %v1675, %v1674
        %v1682 = vpack.c.b16 %v1677, %v1676
        %v1683 = vpack.c.b16 %v1679, %v1678
        %vm1688 = vcmask 523264
        %v1690 = vsel %vm1688, %v1648, 0
        %1692 = vmatprep.subr.bf16.mxu0 0
        %1693 = vmatpush1.bf16.msra.mxu0 0
        %1694 = vmatprep.subr.bf16.mxu0 0
        %1695 = vmatpush1.bf16.msra.mxu0 0
        %1696 = vmatprep.subr.bf16.mxu0 0
        %1697 = vmatpush1.bf16.msra.mxu0 0
        %1698 = vmatprep.subr.bf16.mxu0 0
        %1699 = vmatpush1.bf16.msra.mxu0 0
        %1700 = vmatprep.subr.bf16.mxu0 0
        %1701 = vmatpush1.bf16.msra.mxu0 %v1683
        %1702 = vmatprep.subr.bf16.mxu0 0
        %1703 = vmatpush1.bf16.msra.mxu0 %v1682
        %1704 = vmatprep.subr.bf16.mxu0 0
        %1705 = vmatpush1.bf16.msra.mxu0 %v1681
        %1706 = vmatprep.subr.bf16.mxu0 0
        %1707 = vmatpush1.bf16.msra.mxu0 %v1680
        %1708 = vmatprep.subr.bf16.mxu0 0
        %1709 = vmatpush2.bf16.msra.mxu0 0
        %1710 = vmatprep.subr.bf16.mxu0 0
        %1711 = vmatpush2.bf16.msra.mxu0 0
        %1712 = vmatprep.subr.bf16.mxu0 0
        %1713 = vmatpush2.bf16.msra.mxu0 0
        %1714 = vmatprep.subr.bf16.mxu0 0
        %1715 = vmatpush2.bf16.msra.mxu0 0
        %1716 = vmatprep.subr.bf16.mxu0 0
        %1717 = vmatpush2.bf16.msra.mxu0 0
        %1718 = vmatprep.subr.bf16.mxu0 0
        %1719 = vmatpush2.bf16.msra.mxu0 0
        %1720 = vmatprep.subr.bf16.mxu0 0
        %1721 = vmatpush2.bf16.msra.mxu0 0
        %1722 = vmatprep.subr.bf16.mxu0 0
        %1723 = vmatpush2.bf16.msra.mxu0 0
        %1724 = vmatprep.mubr.bf16.mxu0 0
        %1725 = vmatmul.mubr.bf16.gmra.mxu0 %v1690
        %v1726 = vpop.f32.mrf.mxu0
        %v1727 = vadd.f32 %v1662, %v1726
        %v1728 = vpop.f32.mrf.mxu0
        %v1729 = vpop.f32.mrf.mxu0
        %v1730 = vpop.f32.mrf.mxu0
        %1731 = vdwg.mxu0
        %v1732 = vadd.f32 %v1579, %v1727
        %v1733 = vld [vmem:[%s18] sm:$0x1]
        %v1734 = vld [vmem:[%s19] sm:$0x1]
        %v1735 = vsel %vm972, %v1732, 0.0
        %1736 = vadd.xlane.f32.xlu0 %v1735
        %v1737 = vpop.xlane.xlu0 %1736
        %v1738 = vmul.f32 %v1737, %v1555
        %v1739 = vsub.f32 %v1732, %v1738
        %v1740 = vmul.f32 %v1739, %v1739
        %v1741 = vsel %vm972, %v1740, 0.0
        %1742 = vadd.xlane.f32.xlu0 %v1741
        %v1743 = vpop.xlane.xlu0 %1742
        %v1744 = vmul.f32 %v1743, %v1555
        %v1745 = vadd.f32 %v1744, 1e-05
        %v1746 = vrsqrt.pop %v1745
        %v1747 = vmul.f32 %v1739, %v1746
        %v1749 = vlaneseq
        %v1750 = vshrl.u32 %v1749, 7
        %v1751 = vsub.s32 0, %v1750
        %v1752 = vrot.slane %v1733, %v1751
        %v1754 = vmul.f32 %v1747, %v1752
        %v1756 = vlaneseq
        %v1757 = vshrl.u32 %v1756, 7
        %v1758 = vsub.s32 0, %v1757
        %v1759 = vrot.slane %v1734, %v1758
        %v1761 = vadd.f32 %v1754, %v1759
        %1762 = vst.msk [vmem:[%s781] sm:$0xff] %vm972, %v1761
        %s1763 = sand.u32 %s506, 1
        %s1764 = scalar_lea.sflag [#allocation7], %s1763
        %s1765 = sand.u32 %s506, 1
        %s1766 = smul.addr %s1765, 8
        %s1767 = scalar_lea.vmem [#allocation16], %s1766
        // Predicated region
        $region129: #{tpu_custom_call.1} parent=99 // pred_check
          %p1768 = pneg %p516
        $region130: #{tpu_custom_call.1} parent=99 // pred_check_branch
          %1770 = sbr.rel (%p1768) target = $region132
        $region131: #{tpu_custom_call.1} parent=99 // pred_region
          %s1772 = ssub.s32 128, 128
          %1773 = vsyncadd %s1764, %s1772
          %s1774 = sadd.s32 %s45, %s44
          %s1775 = smul.addr %s1774, 128
          %s1776 = scalar_lea.hbm %s20, %s1775
          %s1778 = sshll.u32 %s1767, 4
          %s1779 = int_to_ptr.vmem [resolvable:$true] %s1778
          %1781 = dma.vmem_to_hbm [thread:$0]  %s1779, 128, %s1776, %s1764
        $region132: #{tpu_custom_call.1} parent=99 // pred_fallthru
          _
      $region100: #{tpu_custom_call.1} parent=5 // pred_fallthru
        _
      %p1782 = scmp.le.s32.totalorder 2, %s35
      // Predicated region
      $region133: #{tpu_custom_call.1} parent=5 // pred_check
        %p1783 = pneg %p1782
      $region134: #{tpu_custom_call.1} parent=5 // pred_check_branch
        %1785 = sbr.rel (%p1783) target = $region136
      $region135: #{tpu_custom_call.1} parent=5 // pred_region
        %s1786 = ssub.s32 %s35, 2
        // Predicated region
        $region137: #{tpu_custom_call.1} parent=135 // pred_check
          %p1787 = pneg %p522
        $region138: #{tpu_custom_call.1} parent=135 // pred_check_branch
          %1789 = sbr.rel (%p1787) target = $region140
        $region139: #{tpu_custom_call.1} parent=135 // pred_region
          %s1790 = sand.u32 %s507, 1
          %s1791 = scalar_lea.sflag [#allocation7], %s1790
          %s1792 = sand.u32 %s507, 1
          %s1793 = smul.addr %s1792, 8
          %s1794 = scalar_lea.vmem [#allocation16], %s1793
          %1795 = dma.done %s1791, 128
        $region140: #{tpu_custom_call.1} parent=135 // pred_fallthru
          _
      $region136: #{tpu_custom_call.1} parent=5 // pred_fallthru
        _
    $region6: #{tpu_custom_call.1} parent=1 // loop_footer
      %s39 = sadd.s32 1, %s35
    $region7: #{tpu_custom_call.1} parent=1 // loop_footer_branch
      %34 = sbr.rel target = $region3
    $region8: #{tpu_custom_call.1} parent=1 // loop_exit
      _
    %1796 = vsyncpa [#allocation6], 1
    %s1797 = scalar_lea.sflag [#allocation6], 1
    %1798 = vsyncpa %s1797, 1
    %1799 = vsyncpa [#allocation9], 1
    %1800 = vsyncpa [#allocation12], 1
    %1801 = vsyncpa [#allocation15], 1
    %1802 = vsyncpa [#allocation7], 1
    %s1803 = scalar_lea.sflag [#allocation7], 1
    %1804 = vsyncpa %s1803, 1

</llo_original>
